<compile_context>
chip_gen: v7x
topology: tpu7x:2x2x1
jax: 0.10.0
libtpu: 0.0.40
codegen_flags: <defaults>
</compile_context>

<pallas_src>
import jax
import jax.numpy as jnp
from jax.experimental import pallas as pl
from jax.experimental.pallas import tpu as pltpu

VISION_EMBED_DIM = 64
PORTION_DIM = 12
OUTPUT_DIM = 64
NUM_CLASSES = 5
IMG_C, IMG_H, IMG_W = 3, 16, 16       # raw image fed to the (stubbed) encoder
MID_H = MID_W = 32                    # fixed by `x.view(batch, 1, 32, 32)`
SPATIAL = MID_H * MID_W               # 1024
NUM_CONV_CH = 3
FEAT_DIM = NUM_CONV_CH * SPATIAL      # 3072 (channel-major co,h,w)
LANE_PAD = 128                        # pad narrow class dim to a full lane width


# ----------------------------------------------------------------------------
# Fused forward kernel
# ----------------------------------------------------------------------------
def fused_forward_kernel(x1_ref, x2_ref, enc_w_ref, enc_b_ref,
                         bil_w2d_ref, bil_b_ref, fold_w_ref, fold_b_ref,
                         cls_w_ref, cls_b_ref, out_ref):
    bp = x1_ref.shape[0]

    # --- image encoder stub: flatten + linear projection (MXU, bf16 in, f32 acc)
    # TODO(synk): cibv.CustomIbvisEncoder is external; stubbed as a linear proj.
    emb = jnp.dot(x1_ref[...], enc_w_ref[...],
                  preferred_element_type=jnp.float32) + enc_b_ref[...]

    # --- nn.Bilinear(vision_embed_dim, portion_dim, output_dim):
    #     pooled[b,o] = sum_{i,j} emb[b,i] * W[o,i,j] * x2[b,j] + bias[o]
    #     ONE lane-dense MXU matmul: T[b, j*64+o] = sum_i emb[b,i] * W[o,i,j],
    #     then a 12-group weighted VPU reduce against x2.
    T = jnp.dot(emb.astype(jnp.bfloat16), bil_w2d_ref[...],
                preferred_element_type=jnp.float32)            # (bp, 768) f32
    x2 = x2_ref[...]                                            # (bp, 12)  f32
    acc = bil_b_ref[...] + jnp.zeros((bp, OUTPUT_DIM), jnp.float32)
    for j in range(PORTION_DIM):
        acc = acc + T[:, j * OUTPUT_DIM:(j + 1) * OUTPUT_DIM] * x2[:, j:j + 1]
    pooled = acc                                                # (bp, 64) f32

    # --- nn.Linear(64 -> 1024) + Conv2d(1,3,3,pad=1) + BatchNorm2d(eval) folded
    #     at init into a single lane-dense (64, 3072) matmul; ReLU epilogue f32.
    feat = jnp.maximum(
        jnp.dot(pooled.astype(jnp.bfloat16), fold_w_ref[...],
                preferred_element_type=jnp.float32) + fold_b_ref[...],
        0.0)                                                    # (bp, 3072) f32

    # --- classifier stub: global-average-pool per channel (XLU lane reduce)
    #     + Linear(3 -> 5) as a pure-VPU epilogue padded to 128 lanes, so the
    #     only HBM store is a full, unmasked (bp, 128) write.
    # TODO(synk): CustomMobileNet(5) is not defined in the module; stubbed.
    inv_sp = jnp.float32(1.0 / SPATIAL)
    logits = cls_b_ref[...] + jnp.zeros((bp, LANE_PAD), jnp.float32)
    for c in range(NUM_CONV_CH):
        pool_c = feat[:, c * SPATIAL:(c + 1) * SPATIAL].sum(
            axis=-1, keepdims=True) * inv_sp                    # (bp, 1)
        logits = logits + pool_c * cls_w_ref[c:c + 1, :]        # (bp,1)*(1,128)
    out_ref[...] = logits


@jax.jit
def venezia_forward(params, x_1, x_2):
    B = x_1.shape[0]
    b_pad = max(8, ((B + 7) // 8) * 8)        # sublane-dense batch
    # Pre-flatten / pre-pad / pre-cast x1 to bf16 in the wrapper (halves its DMA).
    x1_flat = x_1.reshape(B, -1).astype(jnp.bfloat16)
    x1_p = jnp.zeros((b_pad, x1_flat.shape[1]), jnp.bfloat16).at[:B].set(x1_flat)
    x2_p = jnp.zeros((b_pad, PORTION_DIM), jnp.float32).at[:B].set(
        x_2.astype(jnp.float32))

    logits_pad = pl.pallas_call(
        fused_forward_kernel,
        out_shape=jax.ShapeDtypeStruct((b_pad, LANE_PAD), jnp.float32),
        in_specs=[pl.BlockSpec(memory_space=pltpu.MemorySpace.VMEM)] * 10,
        out_specs=pl.BlockSpec(memory_space=pltpu.MemorySpace.VMEM),
    )(x1_p, x2_p,
      params["enc_w"], params["enc_b"],
      params["bil_w2d"], params["bil_b"],
      params["fold_w"], params["fold_b"],
      params["cls_w_pad"], params["cls_b_pad"])
    return logits_pad[:B, :NUM_CLASSES]


# ----------------------------------------------------------------------------
# Parameters (deterministic synthetic init) + fold precomputation
# ----------------------------------------------------------------------------
def init_params(key):
    ks = jax.random.split(key, 10)
    s = 0.05
    f32 = jnp.float32
    enc_in = IMG_C * IMG_H * IMG_W
    enc_w = s * jax.random.normal(ks[0], (enc_in, VISION_EMBED_DIM), f32)
    enc_b = s * jax.random.normal(ks[1], (1, VISION_EMBED_DIM), f32)
    # nn.Bilinear weight layout (out, in1, in2) = (O, I, J)
    bil = s * jax.random.normal(ks[2], (OUTPUT_DIM, VISION_EMBED_DIM, PORTION_DIM), f32)
    bil_b = s * jax.random.normal(ks[3], (1, OUTPUT_DIM), f32)
    lin_w = s * jax.random.normal(ks[4], (OUTPUT_DIM, SPATIAL), f32)
    lin_b = s * jax.random.normal(ks[5], (1, SPATIAL), f32)
    conv_w = s * jax.random.normal(ks[6], (NUM_CONV_CH, 1, 3, 3), f32)
    conv_b = s * jax.random.normal(ks[7], (NUM_CONV_CH,), f32)
    # BatchNorm2d(3) at default init, eval mode (running stats).
    # TODO(synk): training-mode (batch-statistics) BatchNorm not implemented;
    # the conv+BN fold below is exact only in eval mode.
    eps = 1e-5
    gamma = jnp.ones((NUM_CONV_CH,), f32)
    beta = jnp.zeros((NUM_CONV_CH,), f32)
    rmean = jnp.zeros((NUM_CONV_CH,), f32)
    rvar = jnp.ones((NUM_CONV_CH,), f32)
    bn_scale = gamma / jnp.sqrt(rvar + eps)
    bn_shift = beta - rmean * bn_scale
    # Classifier head stub: 3 -> 5
    cls_w = s * jax.random.normal(ks[8], (NUM_CONV_CH, NUM_CLASSES), f32)
    cls_b = s * jax.random.normal(ks[9], (1, NUM_CLASSES), f32)

    # ---- Fold Conv2d(1,3,3,pad=1)+BN into the preceding Linear (init-time) ----
    # Express the conv as a (1024, 3*1024) matrix by convolving one-hot images.
    eye_imgs = jnp.eye(SPATIAL, dtype=f32).reshape(SPATIAL, 1, MID_H, MID_W)
    conv_mat = jax.lax.conv_general_dilated(
        eye_imgs, conv_w, window_strides=(1, 1), padding="SAME",
        dimension_numbers=("NCHW", "OIHW", "NCHW")).reshape(SPATIAL, FEAT_DIM)
    scale_br = jnp.repeat(bn_scale, SPATIAL)      # channel-major (co, h, w)
    shift_br = jnp.repeat(bn_shift, SPATIAL)
    convb_br = jnp.repeat(conv_b, SPATIAL)
    fold_w = (lin_w @ conv_mat) * scale_br[None, :]                    # (64, 3072)
    fold_b = ((lin_b @ conv_mat)[0] + convb_br) * scale_br + shift_br  # (3072,)

    # ---- Bilinear weight as ONE lane-dense 2-D matrix for a single MXU matmul:
    #      W2d[i, j*O + o] = bil[o, i, j]   ->  (64, 768), 768-wide lane-dense RHS
    bil_w2d = jnp.transpose(bil, (1, 2, 0)).reshape(
        VISION_EMBED_DIM, PORTION_DIM * OUTPUT_DIM)

    # ---- Tiny classifier weights, lane-padded to 128 (pure-VPU epilogue) ----
    cls_w_pad = jnp.zeros((NUM_CONV_CH, LANE_PAD), f32).at[:, :NUM_CLASSES].set(cls_w)
    cls_b_pad = jnp.zeros((1, LANE_PAD), f32).at[:, :NUM_CLASSES].set(cls_b)

    kernel_params = {
        # MXU operands stored bf16; biases / epilogue constants stay f32.
        "enc_w": enc_w.astype(jnp.bfloat16),
        "enc_b": enc_b,
        "bil_w2d": bil_w2d.astype(jnp.bfloat16),
        "bil_b": bil_b,
        "fold_w": fold_w.astype(jnp.bfloat16),
        "fold_b": fold_b.reshape(1, FEAT_DIM),
        "cls_w_pad": cls_w_pad,
        "cls_b_pad": cls_b_pad,
    }
    raw_params = {
        "enc_w": enc_w, "enc_b": enc_b, "bil": bil, "bil_b": bil_b,
        "lin_w": lin_w, "lin_b": lin_b, "conv_w": conv_w, "conv_b": conv_b,
        "bn_scale": bn_scale, "bn_shift": bn_shift,
        "cls_w": cls_w, "cls_b": cls_b,
    }
    return kernel_params, raw_params


# ----------------------------------------------------------------------------
# Pure-JAX reference (unfolded, follows the PyTorch module step-by-step)
# ----------------------------------------------------------------------------
def venezia_reference(raw, x_1, x_2):
    B = x_1.shape[0]
    emb = x_1.reshape(B, -1) @ raw["enc_w"] + raw["enc_b"]
    pooled = jnp.einsum("bi,oij,bj->bo", emb, raw["bil"], x_2) + raw["bil_b"]
    lin = pooled @ raw["lin_w"] + raw["lin_b"]
    img = lin.reshape(B, 1, MID_H, MID_W)
    conv = jax.lax.conv_general_dilated(
        img, raw["conv_w"], (1, 1), "SAME",
        dimension_numbers=("NCHW", "OIHW", "NCHW"))
    conv = conv + raw["conv_b"][None, :, None, None]
    feat = jnp.maximum(conv * raw["bn_scale"][None, :, None, None]
                       + raw["bn_shift"][None, :, None, None], 0.0)
    pool = feat.mean(axis=(2, 3))
    return pool @ raw["cls_w"] + raw["cls_b"]


if __name__ == "__main__":
    key = jax.random.PRNGKey(0)
    k1, k2, kp = jax.random.split(key, 3)
    B = 2
    x_1 = jax.random.normal(k1, (B, IMG_C, IMG_H, IMG_W), jnp.float32)
    x_2 = jax.random.normal(k2, (B, PORTION_DIM), jnp.float32)
    params, raw = init_params(kp)

    out = venezia_forward(params, x_1, x_2)
    jax.block_until_ready(out)
    assert out.shape == (B, NUM_CLASSES), out.shape
    assert jnp.all(jnp.isfinite(out))

    ref = venezia_reference(raw, x_1, x_2)
    max_err = float(jnp.max(jnp.abs(out - ref)))
    assert max_err < 1e-2, max_err
    print("KERNEL_OK")
</pallas_src>

<mosaic_0001>
module attributes {stable_mosaic.version = 11 : i64} {
  func.func @fused_forward_kernel(%arg0: memref<8x768xbf16, #tpu.memory_space<vmem>>, %arg1: memref<8x12xf32, #tpu.memory_space<vmem>>, %arg2: memref<768x64xbf16, #tpu.memory_space<vmem>>, %arg3: memref<1x64xf32, #tpu.memory_space<vmem>>, %arg4: memref<64x768xbf16, #tpu.memory_space<vmem>>, %arg5: memref<1x64xf32, #tpu.memory_space<vmem>>, %arg6: memref<64x3072xbf16, #tpu.memory_space<vmem>>, %arg7: memref<1x3072xf32, #tpu.memory_space<vmem>>, %arg8: memref<3x128xf32, #tpu.memory_space<vmem>>, %arg9: memref<1x128xf32, #tpu.memory_space<vmem>>, %arg10: memref<8x128xf32, #tpu.memory_space<vmem>>) attributes {dimension_semantics = [], scalar_prefetch = 0 : i64, scratch_operands = 0 : i64, tpu.core_type = #tpu.core_type<tc>} {
    %c0 = arith.constant 0 : index
    %c0_0 = arith.constant 0 : index
    %0 = vector.load %arg0[%c0, %c0_0] : memref<8x768xbf16, #tpu.memory_space<vmem>>, vector<8x768xbf16>
    %c0_1 = arith.constant 0 : index
    %c0_2 = arith.constant 0 : index
    %1 = vector.load %arg2[%c0_1, %c0_2] : memref<768x64xbf16, #tpu.memory_space<vmem>>, vector<768x64xbf16>
    %cst = arith.constant dense<0.000000e+00> : vector<8x64xf32>
    %2 = tpu.matmul %0, %1, %cst {dimension_numbers = #tpu.dot_dimension_numbers<[1], [0], [0], [1], [0, 0, 1, 1], [], []>} : vector<8x768xbf16>, vector<768x64xbf16>, vector<8x64xf32> -> vector<8x64xf32>
    %c0_3 = arith.constant 0 : index
    %c0_4 = arith.constant 0 : index
    %3 = vector.load %arg3[%c0_3, %c0_4] : memref<1x64xf32, #tpu.memory_space<vmem>>, vector<1x64xf32>
    %4 = vector.broadcast %3 : vector<1x64xf32> to vector<8x64xf32>
    %5 = arith.addf %2, %4 : vector<8x64xf32>
    %6 = arith.truncf %5 : vector<8x64xf32> to vector<8x64xbf16>
    %c0_5 = arith.constant 0 : index
    %c0_6 = arith.constant 0 : index
    %7 = vector.load %arg4[%c0_5, %c0_6] : memref<64x768xbf16, #tpu.memory_space<vmem>>, vector<64x768xbf16>
    %cst_7 = arith.constant dense<0.000000e+00> : vector<8x768xf32>
    %8 = tpu.matmul %6, %7, %cst_7 {dimension_numbers = #tpu.dot_dimension_numbers<[1], [0], [0], [1], [0, 0, 1, 1], [], []>} : vector<8x64xbf16>, vector<64x768xbf16>, vector<8x768xf32> -> vector<8x768xf32>
    %c0_8 = arith.constant 0 : index
    %c0_9 = arith.constant 0 : index
    %9 = vector.load %arg1[%c0_8, %c0_9] : memref<8x12xf32, #tpu.memory_space<vmem>>, vector<8x12xf32>
    %c0_10 = arith.constant 0 : index
    %c0_11 = arith.constant 0 : index
    %10 = vector.load %arg5[%c0_10, %c0_11] : memref<1x64xf32, #tpu.memory_space<vmem>>, vector<1x64xf32>
    %cst_12 = arith.constant 0.000000e+00 : f32
    %11 = vector.broadcast %cst_12 : f32 to vector<8x64xf32>
    %12 = vector.broadcast %10 : vector<1x64xf32> to vector<8x64xf32>
    %13 = arith.addf %12, %11 : vector<8x64xf32>
    %14 = vector.extract_strided_slice %8 {offsets = [0, 0], sizes = [8, 64], strides = [1, 1]} : vector<8x768xf32> to vector<8x64xf32>
    %15 = vector.extract_strided_slice %9 {offsets = [0, 0], sizes = [8, 1], strides = [1, 1]} : vector<8x12xf32> to vector<8x1xf32>
    %16 = vector.broadcast %15 : vector<8x1xf32> to vector<8x64xf32>
    %17 = arith.mulf %14, %16 : vector<8x64xf32>
    %18 = arith.addf %13, %17 : vector<8x64xf32>
    %19 = vector.extract_strided_slice %8 {offsets = [0, 64], sizes = [8, 64], strides = [1, 1]} : vector<8x768xf32> to vector<8x64xf32>
    %20 = vector.extract_strided_slice %9 {offsets = [0, 1], sizes = [8, 1], strides = [1, 1]} : vector<8x12xf32> to vector<8x1xf32>
    %21 = vector.broadcast %20 : vector<8x1xf32> to vector<8x64xf32>
    %22 = arith.mulf %19, %21 : vector<8x64xf32>
    %23 = arith.addf %18, %22 : vector<8x64xf32>
    %24 = vector.extract_strided_slice %8 {offsets = [0, 128], sizes = [8, 64], strides = [1, 1]} : vector<8x768xf32> to vector<8x64xf32>
    %25 = vector.extract_strided_slice %9 {offsets = [0, 2], sizes = [8, 1], strides = [1, 1]} : vector<8x12xf32> to vector<8x1xf32>
    %26 = vector.broadcast %25 : vector<8x1xf32> to vector<8x64xf32>
    %27 = arith.mulf %24, %26 : vector<8x64xf32>
    %28 = arith.addf %23, %27 : vector<8x64xf32>
    %29 = vector.extract_strided_slice %8 {offsets = [0, 192], sizes = [8, 64], strides = [1, 1]} : vector<8x768xf32> to vector<8x64xf32>
    %30 = vector.extract_strided_slice %9 {offsets = [0, 3], sizes = [8, 1], strides = [1, 1]} : vector<8x12xf32> to vector<8x1xf32>
    %31 = vector.broadcast %30 : vector<8x1xf32> to vector<8x64xf32>
    %32 = arith.mulf %29, %31 : vector<8x64xf32>
    %33 = arith.addf %28, %32 : vector<8x64xf32>
    %34 = vector.extract_strided_slice %8 {offsets = [0, 256], sizes = [8, 64], strides = [1, 1]} : vector<8x768xf32> to vector<8x64xf32>
    %35 = vector.extract_strided_slice %9 {offsets = [0, 4], sizes = [8, 1], strides = [1, 1]} : vector<8x12xf32> to vector<8x1xf32>
    %36 = vector.broadcast %35 : vector<8x1xf32> to vector<8x64xf32>
    %37 = arith.mulf %34, %36 : vector<8x64xf32>
    %38 = arith.addf %33, %37 : vector<8x64xf32>
    %39 = vector.extract_strided_slice %8 {offsets = [0, 320], sizes = [8, 64], strides = [1, 1]} : vector<8x768xf32> to vector<8x64xf32>
    %40 = vector.extract_strided_slice %9 {offsets = [0, 5], sizes = [8, 1], strides = [1, 1]} : vector<8x12xf32> to vector<8x1xf32>
    %41 = vector.broadcast %40 : vector<8x1xf32> to vector<8x64xf32>
    %42 = arith.mulf %39, %41 : vector<8x64xf32>
    %43 = arith.addf %38, %42 : vector<8x64xf32>
    %44 = vector.extract_strided_slice %8 {offsets = [0, 384], sizes = [8, 64], strides = [1, 1]} : vector<8x768xf32> to vector<8x64xf32>
    %45 = vector.extract_strided_slice %9 {offsets = [0, 6], sizes = [8, 1], strides = [1, 1]} : vector<8x12xf32> to vector<8x1xf32>
    %46 = vector.broadcast %45 : vector<8x1xf32> to vector<8x64xf32>
    %47 = arith.mulf %44, %46 : vector<8x64xf32>
    %48 = arith.addf %43, %47 : vector<8x64xf32>
    %49 = vector.extract_strided_slice %8 {offsets = [0, 448], sizes = [8, 64], strides = [1, 1]} : vector<8x768xf32> to vector<8x64xf32>
    %50 = vector.extract_strided_slice %9 {offsets = [0, 7], sizes = [8, 1], strides = [1, 1]} : vector<8x12xf32> to vector<8x1xf32>
    %51 = vector.broadcast %50 : vector<8x1xf32> to vector<8x64xf32>
    %52 = arith.mulf %49, %51 : vector<8x64xf32>
    %53 = arith.addf %48, %52 : vector<8x64xf32>
    %54 = vector.extract_strided_slice %8 {offsets = [0, 512], sizes = [8, 64], strides = [1, 1]} : vector<8x768xf32> to vector<8x64xf32>
    %55 = vector.extract_strided_slice %9 {offsets = [0, 8], sizes = [8, 1], strides = [1, 1]} : vector<8x12xf32> to vector<8x1xf32>
    %56 = vector.broadcast %55 : vector<8x1xf32> to vector<8x64xf32>
    %57 = arith.mulf %54, %56 : vector<8x64xf32>
    %58 = arith.addf %53, %57 : vector<8x64xf32>
    %59 = vector.extract_strided_slice %8 {offsets = [0, 576], sizes = [8, 64], strides = [1, 1]} : vector<8x768xf32> to vector<8x64xf32>
    %60 = vector.extract_strided_slice %9 {offsets = [0, 9], sizes = [8, 1], strides = [1, 1]} : vector<8x12xf32> to vector<8x1xf32>
    %61 = vector.broadcast %60 : vector<8x1xf32> to vector<8x64xf32>
    %62 = arith.mulf %59, %61 : vector<8x64xf32>
    %63 = arith.addf %58, %62 : vector<8x64xf32>
    %64 = vector.extract_strided_slice %8 {offsets = [0, 640], sizes = [8, 64], strides = [1, 1]} : vector<8x768xf32> to vector<8x64xf32>
    %65 = vector.extract_strided_slice %9 {offsets = [0, 10], sizes = [8, 1], strides = [1, 1]} : vector<8x12xf32> to vector<8x1xf32>
    %66 = vector.broadcast %65 : vector<8x1xf32> to vector<8x64xf32>
    %67 = arith.mulf %64, %66 : vector<8x64xf32>
    %68 = arith.addf %63, %67 : vector<8x64xf32>
    %69 = vector.extract_strided_slice %8 {offsets = [0, 704], sizes = [8, 64], strides = [1, 1]} : vector<8x768xf32> to vector<8x64xf32>
    %70 = vector.extract_strided_slice %9 {offsets = [0, 11], sizes = [8, 1], strides = [1, 1]} : vector<8x12xf32> to vector<8x1xf32>
    %71 = vector.broadcast %70 : vector<8x1xf32> to vector<8x64xf32>
    %72 = arith.mulf %69, %71 : vector<8x64xf32>
    %73 = arith.addf %68, %72 : vector<8x64xf32>
    %74 = arith.truncf %73 : vector<8x64xf32> to vector<8x64xbf16>
    %c0_13 = arith.constant 0 : index
    %c0_14 = arith.constant 0 : index
    %75 = vector.load %arg6[%c0_13, %c0_14] : memref<64x3072xbf16, #tpu.memory_space<vmem>>, vector<64x3072xbf16>
    %cst_15 = arith.constant dense<0.000000e+00> : vector<8x3072xf32>
    %76 = tpu.matmul %74, %75, %cst_15 {dimension_numbers = #tpu.dot_dimension_numbers<[1], [0], [0], [1], [0, 0, 1, 1], [], []>} : vector<8x64xbf16>, vector<64x3072xbf16>, vector<8x3072xf32> -> vector<8x3072xf32>
    %c0_16 = arith.constant 0 : index
    %c0_17 = arith.constant 0 : index
    %77 = vector.load %arg7[%c0_16, %c0_17] : memref<1x3072xf32, #tpu.memory_space<vmem>>, vector<1x3072xf32>
    %78 = vector.broadcast %77 : vector<1x3072xf32> to vector<8x3072xf32>
    %79 = arith.addf %76, %78 : vector<8x3072xf32>
    %cst_18 = arith.constant 0.000000e+00 : f32
    %80 = vector.broadcast %cst_18 : f32 to vector<8x3072xf32>
    %81 = arith.maximumf %79, %80 : vector<8x3072xf32>
    %c0_19 = arith.constant 0 : index
    %c0_20 = arith.constant 0 : index
    %82 = vector.load %arg9[%c0_19, %c0_20] : memref<1x128xf32, #tpu.memory_space<vmem>>, vector<1x128xf32>
    %cst_21 = arith.constant 0.000000e+00 : f32
    %83 = vector.broadcast %cst_21 : f32 to vector<8x128xf32>
    %84 = vector.broadcast %82 : vector<1x128xf32> to vector<8x128xf32>
    %85 = arith.addf %84, %83 : vector<8x128xf32>
    %86 = vector.extract_strided_slice %81 {offsets = [0, 0], sizes = [8, 1024], strides = [1, 1]} : vector<8x3072xf32> to vector<8x1024xf32>
    %cst_22 = arith.constant dense<0.000000e+00> : vector<8xf32>
    %87 = vector.multi_reduction <add>, %86, %cst_22 [1] : vector<8x1024xf32> to vector<8xf32>
    %88 = vector.shape_cast %87 : vector<8xf32> to vector<8x1xf32>
    %cst_23 = arith.constant 9.765625E-4 : f32
    %89 = vector.broadcast %cst_23 : f32 to vector<8x1xf32>
    %90 = arith.mulf %88, %89 : vector<8x1xf32>
    %c0_24 = arith.constant 0 : index
    %c0_25 = arith.constant 0 : index
    %91 = vector.load %arg8[%c0_24, %c0_25] : memref<3x128xf32, #tpu.memory_space<vmem>>, vector<1x128xf32>
    %92 = vector.broadcast %90 : vector<8x1xf32> to vector<8x128xf32>
    %93 = vector.broadcast %91 : vector<1x128xf32> to vector<8x128xf32>
    %94 = arith.mulf %92, %93 : vector<8x128xf32>
    %95 = arith.addf %85, %94 : vector<8x128xf32>
    %96 = vector.extract_strided_slice %81 {offsets = [0, 1024], sizes = [8, 1024], strides = [1, 1]} : vector<8x3072xf32> to vector<8x1024xf32>
    %cst_26 = arith.constant dense<0.000000e+00> : vector<8xf32>
    %97 = vector.multi_reduction <add>, %96, %cst_26 [1] : vector<8x1024xf32> to vector<8xf32>
    %98 = vector.shape_cast %97 : vector<8xf32> to vector<8x1xf32>
    %cst_27 = arith.constant 9.765625E-4 : f32
    %99 = vector.broadcast %cst_27 : f32 to vector<8x1xf32>
    %100 = arith.mulf %98, %99 : vector<8x1xf32>
    %c1 = arith.constant 1 : index
    %c0_28 = arith.constant 0 : index
    %101 = vector.load %arg8[%c1, %c0_28] : memref<3x128xf32, #tpu.memory_space<vmem>>, vector<1x128xf32>
    %102 = vector.broadcast %100 : vector<8x1xf32> to vector<8x128xf32>
    %103 = vector.broadcast %101 : vector<1x128xf32> to vector<8x128xf32>
    %104 = arith.mulf %102, %103 : vector<8x128xf32>
    %105 = arith.addf %95, %104 : vector<8x128xf32>
    %106 = vector.extract_strided_slice %81 {offsets = [0, 2048], sizes = [8, 1024], strides = [1, 1]} : vector<8x3072xf32> to vector<8x1024xf32>
    %cst_29 = arith.constant dense<0.000000e+00> : vector<8xf32>
    %107 = vector.multi_reduction <add>, %106, %cst_29 [1] : vector<8x1024xf32> to vector<8xf32>
    %108 = vector.shape_cast %107 : vector<8xf32> to vector<8x1xf32>
    %cst_30 = arith.constant 9.765625E-4 : f32
    %109 = vector.broadcast %cst_30 : f32 to vector<8x1xf32>
    %110 = arith.mulf %108, %109 : vector<8x1xf32>
    %c2 = arith.constant 2 : index
    %c0_31 = arith.constant 0 : index
    %111 = vector.load %arg8[%c2, %c0_31] : memref<3x128xf32, #tpu.memory_space<vmem>>, vector<1x128xf32>
    %112 = vector.broadcast %110 : vector<8x1xf32> to vector<8x128xf32>
    %113 = vector.broadcast %111 : vector<1x128xf32> to vector<8x128xf32>
    %114 = arith.mulf %112, %113 : vector<8x128xf32>
    %115 = arith.addf %105, %114 : vector<8x128xf32>
    %c0_32 = arith.constant 0 : index
    %c0_33 = arith.constant 0 : index
    %116 = vector.load %arg10[%c0_32, %c0_33] : memref<8x128xf32, #tpu.memory_space<vmem>>, vector<8x128xf32>
    tpu.vector_store %arg10[%c0_32, %c0_33], %115 {strides = array<i32>} : memref<8x128xf32, #tpu.memory_space<vmem>>, vector<8x128xf32>,
    return
  }
}

</mosaic_0001>

<llo_original>
// kernel: venezia_forward.1
$region0: #{venezia_forward.1}
  #allocation0 [shape = 'u32[]', space=smem, size = 0x4, offset = 0x4, fixed_abs, tag = 'smem constant byte address 0x4 - core index']
  #allocation1 [shape = 'u32[144,128]{1,0:T(1,128)}', space=vmem, size = 0x12000, scoped, tag = 'internal scratch']
  %s0 = inlined_call_operand.vmem [shape: bf16[8,768], index: 0, kind: input, shape index: {}]
  %s1 = inlined_call_operand.vmem [shape: f32[8,12], index: 1, kind: input, shape index: {}]
  %s2 = inlined_call_operand.vmem [shape: bf16[768,64], index: 2, kind: input, shape index: {}]
  %s3 = inlined_call_operand.vmem [shape: f32[1,64], index: 3, kind: input, shape index: {}]
  %s4 = inlined_call_operand.hbm [shape: bf16[64,768], index: 4, kind: input, shape index: {}]
  %s5 = inlined_call_operand.vmem [shape: f32[1,64], index: 5, kind: input, shape index: {}]
  %s6 = inlined_call_operand.vmem [shape: bf16[64,3072], index: 6, kind: input, shape index: {}]
  %s7 = inlined_call_operand.vmem [shape: f32[1,3072], index: 7, kind: input, shape index: {}]
  %s8 = inlined_call_operand.vmem [shape: f32[3,128], index: 8, kind: input, shape index: {}]
  %s9 = inlined_call_operand.vmem [shape: f32[1,128], index: 9, kind: input, shape index: {}]
  %s10 = inlined_call_operand.vmem [shape: f32[8,128], index: 10, kind: output, shape index: {}]
  %s11 = sld [smem:[#allocation0]]
  $region54: #{venezia_forward.1} parent=0
    _
  %s13 = ssub.s32 1, %s11
  %s14 = scalar_select 0, %s13, %s11
  $region1: #{venezia_forward.1} parent=0
    #allocation2 [shape = 'u8[98304]{0}', space=vmem, size = 0x18000, scoped, tag = 'input window, operand 4, single buffered']
    #allocation3 [shape = 's32[1]{0}', space=sflag, size = 0x4, scoped, tag = 'scoped memory for venezia_forward.1']
    %15 = vsyncpa [#allocation3], 0
    // Predicated region
    $region2: #{venezia_forward.1} parent=1 // pred_check
      _
    $region3: #{venezia_forward.1} parent=1 // pred_check_branch
      %17 = sbr.rel (0) target = $region5
    $region4: #{venezia_forward.1} parent=1 // pred_region
      _
    $region5: #{venezia_forward.1} parent=1 // pred_fallthru
      _
    // Predicated region
    $region6: #{venezia_forward.1} parent=1 // pred_check
      _
    $region7: #{venezia_forward.1} parent=1 // pred_check_branch
      %19 = sbr.rel (0) target = $region9
    $region8: #{venezia_forward.1} parent=1 // pred_region
      _
    $region9: #{venezia_forward.1} parent=1 // pred_fallthru
      _
    // Predicated region
    $region10: #{venezia_forward.1} parent=1 // pred_check
      _
    $region11: #{venezia_forward.1} parent=1 // pred_check_branch
      %21 = sbr.rel (0) target = $region13
    $region12: #{venezia_forward.1} parent=1 // pred_region
      _
    $region13: #{venezia_forward.1} parent=1 // pred_fallthru
      _
    // Predicated region
    $region14: #{venezia_forward.1} parent=1 // pred_check
      _
    $region15: #{venezia_forward.1} parent=1 // pred_check_branch
      %23 = sbr.rel (0) target = $region17
    $region16: #{venezia_forward.1} parent=1 // pred_region
      _
    $region17: #{venezia_forward.1} parent=1 // pred_fallthru
      _
    // Predicated region
    $region18: #{venezia_forward.1} parent=1 // pred_check
      _
    $region19: #{venezia_forward.1} parent=1 // pred_check_branch
      %25 = sbr.rel (0) target = $region21
    $region20: #{venezia_forward.1} parent=1 // pred_region
      %s27 = ssub.s32 3072, 3072
      %28 = vsyncadd [#allocation3], %s27
      %s29 = sshll.u32 [#allocation2], 4
      %s30 = int_to_ptr.vmem [resolvable:$true] %s29
      %35 = dma.hbm_to_vmem [thread:$0]  %s4, 3072, %s30, [#allocation3], 384, 384, 24
    $region21: #{venezia_forward.1} parent=1 // pred_fallthru
      _
    // Predicated region
    $region22: #{venezia_forward.1} parent=1 // pred_check
      _
    $region23: #{venezia_forward.1} parent=1 // pred_check_branch
      %37 = sbr.rel (0) target = $region25
    $region24: #{venezia_forward.1} parent=1 // pred_region
      _
    $region25: #{venezia_forward.1} parent=1 // pred_fallthru
      _
    // Predicated region
    $region26: #{venezia_forward.1} parent=1 // pred_check
      _
    $region27: #{venezia_forward.1} parent=1 // pred_check_branch
      %39 = sbr.rel (0) target = $region29
    $region28: #{venezia_forward.1} parent=1 // pred_region
      _
    $region29: #{venezia_forward.1} parent=1 // pred_fallthru
      _
    // Predicated region
    $region30: #{venezia_forward.1} parent=1 // pred_check
      _
    $region31: #{venezia_forward.1} parent=1 // pred_check_branch
      %41 = sbr.rel (0) target = $region33
    $region32: #{venezia_forward.1} parent=1 // pred_region
      _
    $region33: #{venezia_forward.1} parent=1 // pred_fallthru
      _
    // Predicated region
    $region34: #{venezia_forward.1} parent=1 // pred_check
      _
    $region35: #{venezia_forward.1} parent=1 // pred_check_branch
      %43 = sbr.rel (0) target = $region37
    $region36: #{venezia_forward.1} parent=1 // pred_region
      _
    $region37: #{venezia_forward.1} parent=1 // pred_fallthru
      _
    // Predicated region
    $region38: #{venezia_forward.1} parent=1 // pred_check
      _
    $region39: #{venezia_forward.1} parent=1 // pred_check_branch
      %45 = sbr.rel (0) target = $region41
    $region40: #{venezia_forward.1} parent=1 // pred_region
      _
    $region41: #{venezia_forward.1} parent=1 // pred_fallthru
      _
    // Predicated region
    $region42: #{venezia_forward.1} parent=1 // pred_check
      _
    $region43: #{venezia_forward.1} parent=1 // pred_check_branch
      %47 = sbr.rel (0) target = $region45
    $region44: #{venezia_forward.1} parent=1 // pred_region
      %48 = dma.done [#allocation3], 3072
    $region45: #{venezia_forward.1} parent=1 // pred_fallthru
      _
    %v50 = vld [vmem:[%s0] sm:$0xff]
    %v51 = vld [vmem:[%s0 + $0x8] sm:$0xff]
    %v52 = vld [vmem:[%s0 + $0x10] sm:$0xff]
    %v53 = vld [vmem:[%s2] sm:$0xf]
    %v54 = vld [vmem:[%s2 + $0x4] sm:$0xf]
    %v55 = vld [vmem:[%s2 + $0x8] sm:$0xf]
    %v56 = vld [vmem:[%s2 + $0xc] sm:$0xf]
    %v57 = vld [vmem:[%s2 + $0x10] sm:$0xf]
    %v58 = vld [vmem:[%s2 + $0x14] sm:$0xf]
    %v59 = vld [vmem:[%s2 + $0x18] sm:$0xf]
    %v60 = vld [vmem:[%s2 + $0x1c] sm:$0xf]
    %v61 = vld [vmem:[%s2 + $0x20] sm:$0xf]
    %v62 = vld [vmem:[%s2 + $0x24] sm:$0xf]
    %v63 = vld [vmem:[%s2 + $0x28] sm:$0xf]
    %v64 = vld [vmem:[%s2 + $0x2c] sm:$0xf]
    %v65 = vld [vmem:[%s2 + $0x30] sm:$0xf]
    %v66 = vld [vmem:[%s2 + $0x34] sm:$0xf]
    %v67 = vld [vmem:[%s2 + $0x38] sm:$0xf]
    %v68 = vld [vmem:[%s2 + $0x3c] sm:$0xf]
    %v69 = vld [vmem:[%s2 + $0x40] sm:$0xf]
    %v70 = vld [vmem:[%s2 + $0x44] sm:$0xf]
    %v71 = vld [vmem:[%s2 + $0x48] sm:$0xf]
    %v72 = vld [vmem:[%s2 + $0x4c] sm:$0xf]
    %v73 = vld [vmem:[%s2 + $0x50] sm:$0xf]
    %v74 = vld [vmem:[%s2 + $0x54] sm:$0xf]
    %v75 = vld [vmem:[%s2 + $0x58] sm:$0xf]
    %v76 = vld [vmem:[%s2 + $0x5c] sm:$0xf]
    %v77 = vld [vmem:[%s2 + $0x60] sm:$0xf]
    %v78 = vld [vmem:[%s2 + $0x64] sm:$0xf]
    %v79 = vld [vmem:[%s2 + $0x68] sm:$0xf]
    %v80 = vld [vmem:[%s2 + $0x6c] sm:$0xf]
    %v81 = vld [vmem:[%s2 + $0x70] sm:$0xf]
    %v82 = vld [vmem:[%s2 + $0x74] sm:$0xf]
    %v83 = vld [vmem:[%s2 + $0x78] sm:$0xf]
    %v84 = vld [vmem:[%s2 + $0x7c] sm:$0xf]
    %v85 = vld [vmem:[%s2 + $0x80] sm:$0xf]
    %v86 = vld [vmem:[%s2 + $0x84] sm:$0xf]
    %v87 = vld [vmem:[%s2 + $0x88] sm:$0xf]
    %v88 = vld [vmem:[%s2 + $0x8c] sm:$0xf]
    %v89 = vld [vmem:[%s2 + $0x90] sm:$0xf]
    %v90 = vld [vmem:[%s2 + $0x94] sm:$0xf]
    %v91 = vld [vmem:[%s2 + $0x98] sm:$0xf]
    %v92 = vld [vmem:[%s2 + $0x9c] sm:$0xf]
    %v93 = vld [vmem:[%s2 + $0xa0] sm:$0xf]
    %v94 = vld [vmem:[%s2 + $0xa4] sm:$0xf]
    %v95 = vld [vmem:[%s2 + $0xa8] sm:$0xf]
    %v96 = vld [vmem:[%s2 + $0xac] sm:$0xf]
    %v97 = vld [vmem:[%s2 + $0xb0] sm:$0xf]
    %v98 = vld [vmem:[%s2 + $0xb4] sm:$0xf]
    %v99 = vld [vmem:[%s2 + $0xb8] sm:$0xf]
    %v100 = vld [vmem:[%s2 + $0xbc] sm:$0xf]
    %v101 = vld [vmem:[%s2 + $0xc0] sm:$0xf]
    %v102 = vld [vmem:[%s2 + $0xc4] sm:$0xf]
    %v103 = vld [vmem:[%s2 + $0xc8] sm:$0xf]
    %v104 = vld [vmem:[%s2 + $0xcc] sm:$0xf]
    %v105 = vld [vmem:[%s2 + $0xd0] sm:$0xf]
    %v106 = vld [vmem:[%s2 + $0xd4] sm:$0xf]
    %v107 = vld [vmem:[%s2 + $0xd8] sm:$0xf]
    %v108 = vld [vmem:[%s2 + $0xdc] sm:$0xf]
    %v109 = vld [vmem:[%s2 + $0xe0] sm:$0xf]
    %v110 = vld [vmem:[%s2 + $0xe4] sm:$0xf]
    %v111 = vld [vmem:[%s2 + $0xe8] sm:$0xf]
    %v112 = vld [vmem:[%s2 + $0xec] sm:$0xf]
    %v113 = vld [vmem:[%s2 + $0xf0] sm:$0xf]
    %v114 = vld [vmem:[%s2 + $0xf4] sm:$0xf]
    %v115 = vld [vmem:[%s2 + $0xf8] sm:$0xf]
    %v116 = vld [vmem:[%s2 + $0xfc] sm:$0xf]
    %v117 = vld [vmem:[%s2 + $0x100] sm:$0xf]
    %v118 = vld [vmem:[%s2 + $0x104] sm:$0xf]
    %v119 = vld [vmem:[%s2 + $0x108] sm:$0xf]
    %v120 = vld [vmem:[%s2 + $0x10c] sm:$0xf]
    %v121 = vld [vmem:[%s2 + $0x110] sm:$0xf]
    %v122 = vld [vmem:[%s2 + $0x114] sm:$0xf]
    %v123 = vld [vmem:[%s2 + $0x118] sm:$0xf]
    %v124 = vld [vmem:[%s2 + $0x11c] sm:$0xf]
    %v125 = vld [vmem:[%s2 + $0x120] sm:$0xf]
    %v126 = vld [vmem:[%s2 + $0x124] sm:$0xf]
    %v127 = vld [vmem:[%s2 + $0x128] sm:$0xf]
    %v128 = vld [vmem:[%s2 + $0x12c] sm:$0xf]
    %v129 = vld [vmem:[%s2 + $0x130] sm:$0xf]
    %v130 = vld [vmem:[%s2 + $0x134] sm:$0xf]
    %v131 = vld [vmem:[%s2 + $0x138] sm:$0xf]
    %v132 = vld [vmem:[%s2 + $0x13c] sm:$0xf]
    %v133 = vld [vmem:[%s2 + $0x140] sm:$0xf]
    %v134 = vld [vmem:[%s2 + $0x144] sm:$0xf]
    %v135 = vld [vmem:[%s2 + $0x148] sm:$0xf]
    %v136 = vld [vmem:[%s2 + $0x14c] sm:$0xf]
    %v137 = vld [vmem:[%s2 + $0x150] sm:$0xf]
    %v138 = vld [vmem:[%s2 + $0x154] sm:$0xf]
    %v139 = vld [vmem:[%s2 + $0x158] sm:$0xf]
    %v140 = vld [vmem:[%s2 + $0x15c] sm:$0xf]
    %v141 = vld [vmem:[%s2 + $0x160] sm:$0xf]
    %v142 = vld [vmem:[%s2 + $0x164] sm:$0xf]
    %v143 = vld [vmem:[%s2 + $0x168] sm:$0xf]
    %v144 = vld [vmem:[%s2 + $0x16c] sm:$0xf]
    %v145 = vld [vmem:[%s2 + $0x170] sm:$0xf]
    %v146 = vld [vmem:[%s2 + $0x174] sm:$0xf]
    %v147 = vld [vmem:[%s2 + $0x178] sm:$0xf]
    %v148 = vld [vmem:[%s2 + $0x17c] sm:$0xf]
    %v149 = vld [vmem:[%s3] sm:$0x1]
    %v151 = vlaneseq
    %v152 = vshrl.u32 %v151, 7
    %v153 = vsub.s32 0, %v152
    %v154 = vrot.slane %v149, %v153
    %v159 = vunpack.c.l.b16 %v50
    %v160 = vunpack.c.h.b16 %v50
    %v161 = vunpack.c.l.b16 %v51
    %v162 = vunpack.c.h.b16 %v51
    %v163 = vunpack.c.l.b16 %v52
    %v164 = vunpack.c.h.b16 %v52
    %v165 = vpack.c.b16 %v159, %v159
    %v166 = vpack.c.b16 %v160, %v160
    %v167 = vpack.c.b16 %v161, %v161
    %v168 = vpack.c.b16 %v162, %v162
    %v169 = vpack.c.b16 %v163, %v163
    %v170 = vpack.c.b16 %v164, %v164
    %v273 = vunpack.c.l.b16 %v53
    %v274 = vunpack.c.l.b16 %v54
    %v275 = vunpack.c.l.b16 %v55
    %v276 = vunpack.c.l.b16 %v56
    %v277 = vunpack.c.l.b16 %v57
    %v278 = vunpack.c.l.b16 %v58
    %v279 = vunpack.c.l.b16 %v59
    %v280 = vunpack.c.l.b16 %v60
    %v281 = vunpack.c.l.b16 %v61
    %v282 = vunpack.c.l.b16 %v62
    %v283 = vunpack.c.l.b16 %v63
    %v284 = vunpack.c.l.b16 %v64
    %v285 = vunpack.c.l.b16 %v65
    %v286 = vunpack.c.l.b16 %v66
    %v287 = vunpack.c.l.b16 %v67
    %v288 = vunpack.c.l.b16 %v68
    %v289 = vunpack.c.l.b16 %v69
    %v290 = vunpack.c.l.b16 %v70
    %v291 = vunpack.c.l.b16 %v71
    %v292 = vunpack.c.l.b16 %v72
    %v293 = vunpack.c.l.b16 %v73
    %v294 = vunpack.c.l.b16 %v74
    %v295 = vunpack.c.l.b16 %v75
    %v296 = vunpack.c.l.b16 %v76
    %v297 = vunpack.c.l.b16 %v77
    %v298 = vunpack.c.l.b16 %v78
    %v299 = vunpack.c.l.b16 %v79
    %v300 = vunpack.c.l.b16 %v80
    %v301 = vunpack.c.l.b16 %v81
    %v302 = vunpack.c.l.b16 %v82
    %v303 = vunpack.c.l.b16 %v83
    %v304 = vunpack.c.l.b16 %v84
    %v305 = vunpack.c.l.b16 %v85
    %v306 = vunpack.c.l.b16 %v86
    %v307 = vunpack.c.l.b16 %v87
    %v308 = vunpack.c.l.b16 %v88
    %v309 = vunpack.c.l.b16 %v89
    %v310 = vunpack.c.l.b16 %v90
    %v311 = vunpack.c.l.b16 %v91
    %v312 = vunpack.c.l.b16 %v92
    %v313 = vunpack.c.l.b16 %v93
    %v314 = vunpack.c.l.b16 %v94
    %v315 = vunpack.c.l.b16 %v95
    %v316 = vunpack.c.l.b16 %v96
    %v317 = vunpack.c.l.b16 %v97
    %v318 = vunpack.c.l.b16 %v98
    %v319 = vunpack.c.l.b16 %v99
    %v320 = vunpack.c.l.b16 %v100
    %v321 = vunpack.c.l.b16 %v101
    %v322 = vunpack.c.l.b16 %v102
    %v323 = vunpack.c.l.b16 %v103
    %v324 = vunpack.c.l.b16 %v104
    %v325 = vunpack.c.l.b16 %v105
    %v326 = vunpack.c.l.b16 %v106
    %v327 = vunpack.c.l.b16 %v107
    %v328 = vunpack.c.l.b16 %v108
    %v329 = vunpack.c.l.b16 %v109
    %v330 = vunpack.c.l.b16 %v110
    %v331 = vunpack.c.l.b16 %v111
    %v332 = vunpack.c.l.b16 %v112
    %v333 = vunpack.c.l.b16 %v113
    %v334 = vunpack.c.l.b16 %v114
    %v335 = vunpack.c.l.b16 %v115
    %v336 = vunpack.c.l.b16 %v116
    %v337 = vunpack.c.l.b16 %v117
    %v338 = vunpack.c.l.b16 %v118
    %v339 = vunpack.c.l.b16 %v119
    %v340 = vunpack.c.l.b16 %v120
    %v341 = vunpack.c.l.b16 %v121
    %v342 = vunpack.c.l.b16 %v122
    %v343 = vunpack.c.l.b16 %v123
    %v344 = vunpack.c.l.b16 %v124
    %v345 = vunpack.c.l.b16 %v125
    %v346 = vunpack.c.l.b16 %v126
    %v347 = vunpack.c.l.b16 %v127
    %v348 = vunpack.c.l.b16 %v128
    %v349 = vunpack.c.l.b16 %v129
    %v350 = vunpack.c.l.b16 %v130
    %v351 = vunpack.c.l.b16 %v131
    %v352 = vunpack.c.l.b16 %v132
    %v353 = vunpack.c.l.b16 %v133
    %v354 = vunpack.c.l.b16 %v134
    %v355 = vunpack.c.l.b16 %v135
    %v356 = vunpack.c.l.b16 %v136
    %v357 = vunpack.c.l.b16 %v137
    %v358 = vunpack.c.l.b16 %v138
    %v359 = vunpack.c.l.b16 %v139
    %v360 = vunpack.c.l.b16 %v140
    %v361 = vunpack.c.l.b16 %v141
    %v362 = vunpack.c.l.b16 %v142
    %v363 = vunpack.c.l.b16 %v143
    %v364 = vunpack.c.l.b16 %v144
    %v365 = vunpack.c.l.b16 %v145
    %v366 = vunpack.c.l.b16 %v146
    %v367 = vunpack.c.l.b16 %v147
    %v368 = vunpack.c.l.b16 %v148
    %v369 = vpack.c.b16 %v274, %v273
    %v370 = vpack.c.b16 %v276, %v275
    %v371 = vpack.c.b16 %v278, %v277
    %v372 = vpack.c.b16 %v280, %v279
    %v373 = vpack.c.b16 %v282, %v281
    %v374 = vpack.c.b16 %v284, %v283
    %v375 = vpack.c.b16 %v286, %v285
    %v376 = vpack.c.b16 %v288, %v287
    %v377 = vpack.c.b16 %v290, %v289
    %v378 = vpack.c.b16 %v292, %v291
    %v379 = vpack.c.b16 %v294, %v293
    %v380 = vpack.c.b16 %v296, %v295
    %v381 = vpack.c.b16 %v298, %v297
    %v382 = vpack.c.b16 %v300, %v299
    %v383 = vpack.c.b16 %v302, %v301
    %v384 = vpack.c.b16 %v304, %v303
    %v385 = vpack.c.b16 %v306, %v305
    %v386 = vpack.c.b16 %v308, %v307
    %v387 = vpack.c.b16 %v310, %v309
    %v388 = vpack.c.b16 %v312, %v311
    %v389 = vpack.c.b16 %v314, %v313
    %v390 = vpack.c.b16 %v316, %v315
    %v391 = vpack.c.b16 %v318, %v317
    %v392 = vpack.c.b16 %v320, %v319
    %v393 = vpack.c.b16 %v322, %v321
    %v394 = vpack.c.b16 %v324, %v323
    %v395 = vpack.c.b16 %v326, %v325
    %v396 = vpack.c.b16 %v328, %v327
    %v397 = vpack.c.b16 %v330, %v329
    %v398 = vpack.c.b16 %v332, %v331
    %v399 = vpack.c.b16 %v334, %v333
    %v400 = vpack.c.b16 %v336, %v335
    %v401 = vpack.c.b16 %v338, %v337
    %v402 = vpack.c.b16 %v340, %v339
    %v403 = vpack.c.b16 %v342, %v341
    %v404 = vpack.c.b16 %v344, %v343
    %v405 = vpack.c.b16 %v346, %v345
    %v406 = vpack.c.b16 %v348, %v347
    %v407 = vpack.c.b16 %v350, %v349
    %v408 = vpack.c.b16 %v352, %v351
    %v409 = vpack.c.b16 %v354, %v353
    %v410 = vpack.c.b16 %v356, %v355
    %v411 = vpack.c.b16 %v358, %v357
    %v412 = vpack.c.b16 %v360, %v359
    %v413 = vpack.c.b16 %v362, %v361
    %v414 = vpack.c.b16 %v364, %v363
    %v415 = vpack.c.b16 %v366, %v365
    %v416 = vpack.c.b16 %v368, %v367
    %465 = vmatprep.subr.bf16.mxu0 0
    %466 = vmatpush1.bf16.msra.mxu0 %v369
    %467 = vmatprep.subr.bf16.mxu0 0
    %468 = vmatpush1.bf16.msra.mxu0 %v370
    %469 = vmatprep.subr.bf16.mxu0 0
    %470 = vmatpush1.bf16.msra.mxu0 %v371
    %471 = vmatprep.subr.bf16.mxu0 0
    %472 = vmatpush1.bf16.msra.mxu0 %v372
    %473 = vmatprep.subr.bf16.mxu0 0
    %474 = vmatpush1.bf16.msra.mxu0 %v373
    %475 = vmatprep.subr.bf16.mxu0 0
    %476 = vmatpush1.bf16.msra.mxu0 %v374
    %477 = vmatprep.subr.bf16.mxu0 0
    %478 = vmatpush1.bf16.msra.mxu0 %v375
    %479 = vmatprep.subr.bf16.mxu0 0
    %480 = vmatpush1.bf16.msra.mxu0 %v376
    %481 = vmatprep.subr.bf16.mxu0 0
    %482 = vmatpush1.bf16.msra.mxu0 %v377
    %483 = vmatprep.subr.bf16.mxu0 0
    %484 = vmatpush1.bf16.msra.mxu0 %v378
    %485 = vmatprep.subr.bf16.mxu0 0
    %486 = vmatpush1.bf16.msra.mxu0 %v379
    %487 = vmatprep.subr.bf16.mxu0 0
    %488 = vmatpush1.bf16.msra.mxu0 %v380
    %489 = vmatprep.subr.bf16.mxu0 0
    %490 = vmatpush1.bf16.msra.mxu0 %v381
    %491 = vmatprep.subr.bf16.mxu0 0
    %492 = vmatpush1.bf16.msra.mxu0 %v382
    %493 = vmatprep.subr.bf16.mxu0 0
    %494 = vmatpush1.bf16.msra.mxu0 %v383
    %495 = vmatprep.subr.bf16.mxu0 0
    %496 = vmatpush1.bf16.msra.mxu0 %v384
    %497 = vmatprep.mubr.bf16.mxu0 %v166
    %498 = vmatmul.mubr.bf16.gmra.mrb[0].mxu0 %v165
    %v499 = vpop.f32.mrb[0].mxu0
    %v500 = vadd.f32 %v154, %v499
    %v501 = vpop.f32.mrb[0].mxu0
    %v502 = vpop.f32.mrb[0].mxu0
    %v503 = vpop.f32.mrb[0].mxu0
    %504 = vdwg.mxu0
    %505 = vmatprep.subr.bf16.mxu0 0
    %506 = vmatpush1.bf16.msra.mxu0 %v385
    %507 = vmatprep.subr.bf16.mxu0 0
    %508 = vmatpush1.bf16.msra.mxu0 %v386
    %509 = vmatprep.subr.bf16.mxu0 0
    %510 = vmatpush1.bf16.msra.mxu0 %v387
    %511 = vmatprep.subr.bf16.mxu0 0
    %512 = vmatpush1.bf16.msra.mxu0 %v388
    %513 = vmatprep.subr.bf16.mxu0 0
    %514 = vmatpush1.bf16.msra.mxu0 %v389
    %515 = vmatprep.subr.bf16.mxu0 0
    %516 = vmatpush1.bf16.msra.mxu0 %v390
    %517 = vmatprep.subr.bf16.mxu0 0
    %518 = vmatpush1.bf16.msra.mxu0 %v391
    %519 = vmatprep.subr.bf16.mxu0 0
    %520 = vmatpush1.bf16.msra.mxu0 %v392
    %521 = vmatprep.subr.bf16.mxu0 0
    %522 = vmatpush1.bf16.msra.mxu0 %v393
    %523 = vmatprep.subr.bf16.mxu0 0
    %524 = vmatpush1.bf16.msra.mxu0 %v394
    %525 = vmatprep.subr.bf16.mxu0 0
    %526 = vmatpush1.bf16.msra.mxu0 %v395
    %527 = vmatprep.subr.bf16.mxu0 0
    %528 = vmatpush1.bf16.msra.mxu0 %v396
    %529 = vmatprep.subr.bf16.mxu0 0
    %530 = vmatpush1.bf16.msra.mxu0 %v397
    %531 = vmatprep.subr.bf16.mxu0 0
    %532 = vmatpush1.bf16.msra.mxu0 %v398
    %533 = vmatprep.subr.bf16.mxu0 0
    %534 = vmatpush1.bf16.msra.mxu0 %v399
    %535 = vmatprep.subr.bf16.mxu0 0
    %536 = vmatpush1.bf16.msra.mxu0 %v400
    %537 = vmatprep.mubr.bf16.mxu0 %v168
    %538 = vmatmul.mubr.bf16.gmra.mrb[0].mxu0 %v167
    %v539 = vpop.f32.mrb[0].mxu0
    %v540 = vadd.f32 %v500, %v539
    %v541 = vpop.f32.mrb[0].mxu0
    %v542 = vpop.f32.mrb[0].mxu0
    %v543 = vpop.f32.mrb[0].mxu0
    %544 = vdwg.mxu0
    %545 = vmatprep.subr.bf16.mxu0 0
    %546 = vmatpush1.bf16.msra.mxu0 %v401
    %547 = vmatprep.subr.bf16.mxu0 0
    %548 = vmatpush1.bf16.msra.mxu0 %v402
    %549 = vmatprep.subr.bf16.mxu0 0
    %550 = vmatpush1.bf16.msra.mxu0 %v403
    %551 = vmatprep.subr.bf16.mxu0 0
    %552 = vmatpush1.bf16.msra.mxu0 %v404
    %553 = vmatprep.subr.bf16.mxu0 0
    %554 = vmatpush1.bf16.msra.mxu0 %v405
    %555 = vmatprep.subr.bf16.mxu0 0
    %556 = vmatpush1.bf16.msra.mxu0 %v406
    %557 = vmatprep.subr.bf16.mxu0 0
    %558 = vmatpush1.bf16.msra.mxu0 %v407
    %559 = vmatprep.subr.bf16.mxu0 0
    %560 = vmatpush1.bf16.msra.mxu0 %v408
    %561 = vmatprep.subr.bf16.mxu0 0
    %562 = vmatpush1.bf16.msra.mxu0 %v409
    %563 = vmatprep.subr.bf16.mxu0 0
    %564 = vmatpush1.bf16.msra.mxu0 %v410
    %565 = vmatprep.subr.bf16.mxu0 0
    %566 = vmatpush1.bf16.msra.mxu0 %v411
    %567 = vmatprep.subr.bf16.mxu0 0
    %568 = vmatpush1.bf16.msra.mxu0 %v412
    %569 = vmatprep.subr.bf16.mxu0 0
    %570 = vmatpush1.bf16.msra.mxu0 %v413
    %571 = vmatprep.subr.bf16.mxu0 0
    %572 = vmatpush1.bf16.msra.mxu0 %v414
    %573 = vmatprep.subr.bf16.mxu0 0
    %574 = vmatpush1.bf16.msra.mxu0 %v415
    %575 = vmatprep.subr.bf16.mxu0 0
    %576 = vmatpush1.bf16.msra.mxu0 %v416
    %577 = vmatprep.mubr.bf16.mxu0 %v170
    %578 = vmatmul.mubr.bf16.gmra.mrb[0].mxu0 %v169
    %v579 = vpop.f32.mrb[0].mxu0
    %v580 = vadd.f32 %v540, %v579
    %v581 = vpop.f32.mrb[0].mxu0
    %v582 = vpop.f32.mrb[0].mxu0
    %v583 = vpop.f32.mrb[0].mxu0
    %584 = vdwg.mxu0
    %v585 = vpack.c.bf16 %v580, %v580
    %v586 = vld [vmem:[#allocation2] sm:$0xff]
    %v587 = vld [vmem:[#allocation2 + $0x8] sm:$0xff]
    %v588 = vld [vmem:[#allocation2 + $0x10] sm:$0xff]
    %v589 = vld [vmem:[#allocation2 + $0x18] sm:$0xff]
    %v590 = vld [vmem:[#allocation2 + $0x20] sm:$0xff]
    %v591 = vld [vmem:[#allocation2 + $0x28] sm:$0xff]
    %v592 = vld [vmem:[#allocation2 + $0x30] sm:$0xff]
    %v593 = vld [vmem:[#allocation2 + $0x38] sm:$0xff]
    %v594 = vld [vmem:[#allocation2 + $0x40] sm:$0xff]
    %v595 = vld [vmem:[#allocation2 + $0x48] sm:$0xff]
    %v596 = vld [vmem:[#allocation2 + $0x50] sm:$0xff]
    %v597 = vld [vmem:[#allocation2 + $0x58] sm:$0xff]
    %v598 = vld [vmem:[#allocation2 + $0x60] sm:$0xff]
    %v599 = vld [vmem:[#allocation2 + $0x68] sm:$0xff]
    %v600 = vld [vmem:[#allocation2 + $0x70] sm:$0xff]
    %v601 = vld [vmem:[#allocation2 + $0x78] sm:$0xff]
    %v602 = vld [vmem:[#allocation2 + $0x80] sm:$0xff]
    %v603 = vld [vmem:[#allocation2 + $0x88] sm:$0xff]
    %v604 = vld [vmem:[#allocation2 + $0x90] sm:$0xff]
    %v605 = vld [vmem:[#allocation2 + $0x98] sm:$0xff]
    %v606 = vld [vmem:[#allocation2 + $0xa0] sm:$0xff]
    %v607 = vld [vmem:[#allocation2 + $0xa8] sm:$0xff]
    %v608 = vld [vmem:[#allocation2 + $0xb0] sm:$0xff]
    %v609 = vld [vmem:[#allocation2 + $0xb8] sm:$0xff]
    %v634 = vunpack.c.l.b16 %v586
    %v635 = vunpack.c.h.b16 %v586
    %v636 = vunpack.c.l.b16 %v587
    %v637 = vunpack.c.h.b16 %v587
    %v638 = vunpack.c.l.b16 %v588
    %v639 = vunpack.c.h.b16 %v588
    %v640 = vunpack.c.l.b16 %v589
    %v641 = vunpack.c.h.b16 %v589
    %v642 = vunpack.c.l.b16 %v590
    %v643 = vunpack.c.h.b16 %v590
    %v644 = vunpack.c.l.b16 %v591
    %v645 = vunpack.c.h.b16 %v591
    %v646 = vunpack.c.l.b16 %v592
    %v647 = vunpack.c.h.b16 %v592
    %v648 = vunpack.c.l.b16 %v593
    %v649 = vunpack.c.h.b16 %v593
    %v650 = vunpack.c.l.b16 %v594
    %v651 = vunpack.c.h.b16 %v594
    %v652 = vunpack.c.l.b16 %v595
    %v653 = vunpack.c.h.b16 %v595
    %v654 = vunpack.c.l.b16 %v596
    %v655 = vunpack.c.h.b16 %v596
    %v656 = vunpack.c.l.b16 %v597
    %v657 = vunpack.c.h.b16 %v597
    %v658 = vunpack.c.l.b16 %v598
    %v659 = vunpack.c.h.b16 %v598
    %v660 = vunpack.c.l.b16 %v599
    %v661 = vunpack.c.h.b16 %v599
    %v662 = vunpack.c.l.b16 %v600
    %v663 = vunpack.c.h.b16 %v600
    %v664 = vunpack.c.l.b16 %v601
    %v665 = vunpack.c.h.b16 %v601
    %v666 = vunpack.c.l.b16 %v602
    %v667 = vunpack.c.h.b16 %v602
    %v668 = vunpack.c.l.b16 %v603
    %v669 = vunpack.c.h.b16 %v603
    %v670 = vunpack.c.l.b16 %v604
    %v671 = vunpack.c.h.b16 %v604
    %v672 = vunpack.c.l.b16 %v605
    %v673 = vunpack.c.h.b16 %v605
    %v674 = vunpack.c.l.b16 %v606
    %v675 = vunpack.c.h.b16 %v606
    %v676 = vunpack.c.l.b16 %v607
    %v677 = vunpack.c.h.b16 %v607
    %v678 = vunpack.c.l.b16 %v608
    %v679 = vunpack.c.h.b16 %v608
    %v680 = vunpack.c.l.b16 %v609
    %v681 = vunpack.c.h.b16 %v609
    %v682 = vpack.c.b16 %v640, %v634
    %v683 = vpack.c.b16 %v641, %v635
    %v684 = vpack.c.b16 %v642, %v636
    %v685 = vpack.c.b16 %v643, %v637
    %v686 = vpack.c.b16 %v644, %v638
    %v687 = vpack.c.b16 %v645, %v639
    %v688 = vpack.c.b16 %v652, %v646
    %v689 = vpack.c.b16 %v653, %v647
    %v690 = vpack.c.b16 %v654, %v648
    %v691 = vpack.c.b16 %v655, %v649
    %v692 = vpack.c.b16 %v656, %v650
    %v693 = vpack.c.b16 %v657, %v651
    %v694 = vpack.c.b16 %v664, %v658
    %v695 = vpack.c.b16 %v665, %v659
    %v696 = vpack.c.b16 %v666, %v660
    %v697 = vpack.c.b16 %v667, %v661
    %v698 = vpack.c.b16 %v668, %v662
    %v699 = vpack.c.b16 %v669, %v663
    %v700 = vpack.c.b16 %v676, %v670
    %v701 = vpack.c.b16 %v677, %v671
    %v702 = vpack.c.b16 %v678, %v672
    %v703 = vpack.c.b16 %v679, %v673
    %v704 = vpack.c.b16 %v680, %v674
    %v705 = vpack.c.b16 %v681, %v675
    %vm730 = vcmask 523264
    %v732 = vsel %vm730, %v585, 0
    %734 = vmatprep.subr.bf16.mxu0 %v683
    %735 = vmatpush1.bf16.msra.mxu0 %v682
    %736 = vmatprep.subr.bf16.mxu0 %v689
    %737 = vmatpush1.bf16.msra.mxu0 %v688
    %738 = vmatprep.subr.bf16.mxu0 %v695
    %739 = vmatpush1.bf16.msra.mxu0 %v694
    %740 = vmatprep.subr.bf16.mxu0 %v701
    %741 = vmatpush1.bf16.msra.mxu0 %v700
    %742 = vmatprep.subr.bf16.mxu0 0
    %743 = vmatpush1.bf16.msra.mxu0 0
    %744 = vmatprep.subr.bf16.mxu0 0
    %745 = vmatpush1.bf16.msra.mxu0 0
    %746 = vmatprep.subr.bf16.mxu0 0
    %747 = vmatpush1.bf16.msra.mxu0 0
    %748 = vmatprep.subr.bf16.mxu0 0
    %749 = vmatpush1.bf16.msra.mxu0 0
    %750 = vmatprep.subr.bf16.mxu0 0
    %751 = vmatpush1.bf16.msra.mxu0 0
    %752 = vmatprep.subr.bf16.mxu0 0
    %753 = vmatpush1.bf16.msra.mxu0 0
    %754 = vmatprep.subr.bf16.mxu0 0
    %755 = vmatpush1.bf16.msra.mxu0 0
    %756 = vmatprep.subr.bf16.mxu0 0
    %757 = vmatpush1.bf16.msra.mxu0 0
    %758 = vmatprep.subr.bf16.mxu0 0
    %759 = vmatpush1.bf16.msra.mxu0 0
    %760 = vmatprep.subr.bf16.mxu0 0
    %761 = vmatpush1.bf16.msra.mxu0 0
    %762 = vmatprep.subr.bf16.mxu0 0
    %763 = vmatpush1.bf16.msra.mxu0 0
    %764 = vmatprep.subr.bf16.mxu0 0
    %765 = vmatpush1.bf16.msra.mxu0 0
    %766 = vmatprep.mubr.bf16.mxu0 0
    %767 = vmatmul.mubr.bf16.gmra.mrb[0].mxu0 %v732
    %v768 = vpop.f32.mrb[0].mxu0
    %v769 = vadd.f32 0.0, %v768
    %v770 = vpop.f32.mrb[0].mxu0
    %v771 = vadd.f32 0.0, %v770
    %v772 = vpop.f32.mrb[0].mxu0
    %v773 = vpop.f32.mrb[0].mxu0
    %774 = vdwg.mxu0
    %775 = vmatprep.subr.bf16.mxu0 %v685
    %776 = vmatpush1.bf16.msra.mxu0 %v684
    %777 = vmatprep.subr.bf16.mxu0 %v691
    %778 = vmatpush1.bf16.msra.mxu0 %v690
    %779 = vmatprep.subr.bf16.mxu0 %v697
    %780 = vmatpush1.bf16.msra.mxu0 %v696
    %781 = vmatprep.subr.bf16.mxu0 %v703
    %782 = vmatpush1.bf16.msra.mxu0 %v702
    %783 = vmatprep.subr.bf16.mxu0 0
    %784 = vmatpush1.bf16.msra.mxu0 0
    %785 = vmatprep.subr.bf16.mxu0 0
    %786 = vmatpush1.bf16.msra.mxu0 0
    %787 = vmatprep.subr.bf16.mxu0 0
    %788 = vmatpush1.bf16.msra.mxu0 0
    %789 = vmatprep.subr.bf16.mxu0 0
    %790 = vmatpush1.bf16.msra.mxu0 0
    %791 = vmatprep.subr.bf16.mxu0 0
    %792 = vmatpush1.bf16.msra.mxu0 0
    %793 = vmatprep.subr.bf16.mxu0 0
    %794 = vmatpush1.bf16.msra.mxu0 0
    %795 = vmatprep.subr.bf16.mxu0 0
    %796 = vmatpush1.bf16.msra.mxu0 0
    %797 = vmatprep.subr.bf16.mxu0 0
    %798 = vmatpush1.bf16.msra.mxu0 0
    %799 = vmatprep.subr.bf16.mxu0 0
    %800 = vmatpush1.bf16.msra.mxu0 0
    %801 = vmatprep.subr.bf16.mxu0 0
    %802 = vmatpush1.bf16.msra.mxu0 0
    %803 = vmatprep.subr.bf16.mxu0 0
    %804 = vmatpush1.bf16.msra.mxu0 0
    %805 = vmatprep.subr.bf16.mxu0 0
    %806 = vmatpush1.bf16.msra.mxu0 0
    %807 = vmatprep.mubr.bf16.mxu0 0
    %808 = vmatmul.mubr.bf16.gmra.mrb[0].mxu0 %v732
    %v809 = vpop.f32.mrb[0].mxu0
    %v810 = vadd.f32 0.0, %v809
    %v811 = vpop.f32.mrb[0].mxu0
    %v812 = vadd.f32 0.0, %v811
    %v813 = vpop.f32.mrb[0].mxu0
    %v814 = vpop.f32.mrb[0].mxu0
    %815 = vdwg.mxu0
    %816 = vmatprep.subr.bf16.mxu0 %v687
    %817 = vmatpush1.bf16.msra.mxu0 %v686
    %818 = vmatprep.subr.bf16.mxu0 %v693
    %819 = vmatpush1.bf16.msra.mxu0 %v692
    %820 = vmatprep.subr.bf16.mxu0 %v699
    %821 = vmatpush1.bf16.msra.mxu0 %v698
    %822 = vmatprep.subr.bf16.mxu0 %v705
    %823 = vmatpush1.bf16.msra.mxu0 %v704
    %824 = vmatprep.subr.bf16.mxu0 0
    %825 = vmatpush1.bf16.msra.mxu0 0
    %826 = vmatprep.subr.bf16.mxu0 0
    %827 = vmatpush1.bf16.msra.mxu0 0
    %828 = vmatprep.subr.bf16.mxu0 0
    %829 = vmatpush1.bf16.msra.mxu0 0
    %830 = vmatprep.subr.bf16.mxu0 0
    %831 = vmatpush1.bf16.msra.mxu0 0
    %832 = vmatprep.subr.bf16.mxu0 0
    %833 = vmatpush1.bf16.msra.mxu0 0
    %834 = vmatprep.subr.bf16.mxu0 0
    %835 = vmatpush1.bf16.msra.mxu0 0
    %836 = vmatprep.subr.bf16.mxu0 0
    %837 = vmatpush1.bf16.msra.mxu0 0
    %838 = vmatprep.subr.bf16.mxu0 0
    %839 = vmatpush1.bf16.msra.mxu0 0
    %840 = vmatprep.subr.bf16.mxu0 0
    %841 = vmatpush1.bf16.msra.mxu0 0
    %842 = vmatprep.subr.bf16.mxu0 0
    %843 = vmatpush1.bf16.msra.mxu0 0
    %844 = vmatprep.subr.bf16.mxu0 0
    %845 = vmatpush1.bf16.msra.mxu0 0
    %846 = vmatprep.subr.bf16.mxu0 0
    %847 = vmatpush1.bf16.msra.mxu0 0
    %848 = vmatprep.mubr.bf16.mxu0 0
    %849 = vmatmul.mubr.bf16.gmra.mrb[0].mxu0 %v732
    %v850 = vpop.f32.mrb[0].mxu0
    %v851 = vadd.f32 0.0, %v850
    %v852 = vpop.f32.mrb[0].mxu0
    %v853 = vadd.f32 0.0, %v852
    %v854 = vpop.f32.mrb[0].mxu0
    %v855 = vpop.f32.mrb[0].mxu0
    %856 = vdwg.mxu0
    %v857 = vld [vmem:[%s1] sm:$0xff]
    %v858 = vld [vmem:[%s5] sm:$0x1]
    %v860 = vlaneseq
    %v861 = vshrl.u32 %v860, 7
    %v862 = vsub.s32 0, %v861
    %v863 = vrot.slane %v858, %v862
    %v865 = vadd.f32 %v863, 0.0
    %867 = vset.pattern.permute.xlu0 0
    %868 = vperm.xlu0 %867, %v857
    %v869 = vpop.permute.xlu0 %868
    %v871 = vmul.f32 %v769, %v869
    %v872 = vadd.f32 %v865, %v871
    %873 = vset.pattern.permute.xlu0 1
    %874 = vperm.xlu0 %873, %v857
    %v875 = vpop.permute.xlu0 %874
    %v877 = vmul.f32 %v769, %v875
    %879 = vrot.lane.b32.xlu0 %v877, 64
    %v880 = vpop.permute.xlu0 %879
    %v882 = vadd.f32 %v872, %v880
    %883 = vset.pattern.permute.xlu0 2
    %884 = vperm.xlu0 %883, %v857
    %v885 = vpop.permute.xlu0 %884
    %v887 = vmul.f32 %v771, %v885
    %v888 = vadd.f32 %v882, %v887
    %889 = vset.pattern.permute.xlu0 3
    %890 = vperm.xlu0 %889, %v857
    %v891 = vpop.permute.xlu0 %890
    %v893 = vmul.f32 %v771, %v891
    %895 = vrot.lane.b32.xlu0 %v893, 64
    %v896 = vpop.permute.xlu0 %895
    %v898 = vadd.f32 %v888, %v896
    %899 = vset.pattern.permute.xlu0 4
    %900 = vperm.xlu0 %899, %v857
    %v901 = vpop.permute.xlu0 %900
    %v903 = vmul.f32 %v810, %v901
    %v904 = vadd.f32 %v898, %v903
    %905 = vset.pattern.permute.xlu0 5
    %906 = vperm.xlu0 %905, %v857
    %v907 = vpop.permute.xlu0 %906
    %v909 = vmul.f32 %v810, %v907
    %911 = vrot.lane.b32.xlu0 %v909, 64
    %v912 = vpop.permute.xlu0 %911
    %v914 = vadd.f32 %v904, %v912
    %915 = vset.pattern.permute.xlu0 6
    %916 = vperm.xlu0 %915, %v857
    %v917 = vpop.permute.xlu0 %916
    %v919 = vmul.f32 %v812, %v917
    %v920 = vadd.f32 %v914, %v919
    %921 = vset.pattern.permute.xlu0 7
    %922 = vperm.xlu0 %921, %v857
    %v923 = vpop.permute.xlu0 %922
    %v925 = vmul.f32 %v812, %v923
    %927 = vrot.lane.b32.xlu0 %v925, 64
    %v928 = vpop.permute.xlu0 %927
    %v930 = vadd.f32 %v920, %v928
    %931 = vset.pattern.permute.xlu0 8
    %932 = vperm.xlu0 %931, %v857
    %v933 = vpop.permute.xlu0 %932
    %v935 = vmul.f32 %v851, %v933
    %v936 = vadd.f32 %v930, %v935
    %937 = vset.pattern.permute.xlu0 9
    %938 = vperm.xlu0 %937, %v857
    %v939 = vpop.permute.xlu0 %938
    %v941 = vmul.f32 %v851, %v939
    %943 = vrot.lane.b32.xlu0 %v941, 64
    %v944 = vpop.permute.xlu0 %943
    %v946 = vadd.f32 %v936, %v944
    %947 = vset.pattern.permute.xlu0 10
    %948 = vperm.xlu0 %947, %v857
    %v949 = vpop.permute.xlu0 %948
    %v951 = vmul.f32 %v853, %v949
    %v952 = vadd.f32 %v946, %v951
    %953 = vset.pattern.permute.xlu0 11
    %954 = vperm.xlu0 %953, %v857
    %v955 = vpop.permute.xlu0 %954
    %v957 = vmul.f32 %v853, %v955
    %959 = vrot.lane.b32.xlu0 %v957, 64
    %v960 = vpop.permute.xlu0 %959
    %v962 = vadd.f32 %v952, %v960
    %v963 = vpack.c.bf16 %v962, %v962
    %v964 = vld [vmem:[%s6] sm:$0xff]
    %v965 = vld [vmem:[%s6 + $0x8] sm:$0xff]
    %v966 = vld [vmem:[%s6 + $0x10] sm:$0xff]
    %v967 = vld [vmem:[%s6 + $0x18] sm:$0xff]
    %v968 = vld [vmem:[%s6 + $0x20] sm:$0xff]
    %v969 = vld [vmem:[%s6 + $0x28] sm:$0xff]
    %v970 = vld [vmem:[%s6 + $0x30] sm:$0xff]
    %v971 = vld [vmem:[%s6 + $0x38] sm:$0xff]
    %v972 = vld [vmem:[%s6 + $0x40] sm:$0xff]
    %v973 = vld [vmem:[%s6 + $0x48] sm:$0xff]
    %v974 = vld [vmem:[%s6 + $0x50] sm:$0xff]
    %v975 = vld [vmem:[%s6 + $0x58] sm:$0xff]
    %v976 = vld [vmem:[%s6 + $0x60] sm:$0xff]
    %v977 = vld [vmem:[%s6 + $0x68] sm:$0xff]
    %v978 = vld [vmem:[%s6 + $0x70] sm:$0xff]
    %v979 = vld [vmem:[%s6 + $0x78] sm:$0xff]
    %v980 = vld [vmem:[%s6 + $0x80] sm:$0xff]
    %v981 = vld [vmem:[%s6 + $0x88] sm:$0xff]
    %v982 = vld [vmem:[%s6 + $0x90] sm:$0xff]
    %v983 = vld [vmem:[%s6 + $0x98] sm:$0xff]
    %v984 = vld [vmem:[%s6 + $0xa0] sm:$0xff]
    %v985 = vld [vmem:[%s6 + $0xa8] sm:$0xff]
    %v986 = vld [vmem:[%s6 + $0xb0] sm:$0xff]
    %v987 = vld [vmem:[%s6 + $0xb8] sm:$0xff]
    %v988 = vld [vmem:[%s6 + $0xc0] sm:$0xff]
    %v989 = vld [vmem:[%s6 + $0xc8] sm:$0xff]
    %v990 = vld [vmem:[%s6 + $0xd0] sm:$0xff]
    %v991 = vld [vmem:[%s6 + $0xd8] sm:$0xff]
    %v992 = vld [vmem:[%s6 + $0xe0] sm:$0xff]
    %v993 = vld [vmem:[%s6 + $0xe8] sm:$0xff]
    %v994 = vld [vmem:[%s6 + $0xf0] sm:$0xff]
    %v995 = vld [vmem:[%s6 + $0xf8] sm:$0xff]
    %v996 = vld [vmem:[%s6 + $0x100] sm:$0xff]
    %v997 = vld [vmem:[%s6 + $0x108] sm:$0xff]
    %v998 = vld [vmem:[%s6 + $0x110] sm:$0xff]
    %v999 = vld [vmem:[%s6 + $0x118] sm:$0xff]
    %v1000 = vld [vmem:[%s6 + $0x120] sm:$0xff]
    %v1001 = vld [vmem:[%s6 + $0x128] sm:$0xff]
    %v1002 = vld [vmem:[%s6 + $0x130] sm:$0xff]
    %v1003 = vld [vmem:[%s6 + $0x138] sm:$0xff]
    %v1004 = vld [vmem:[%s6 + $0x140] sm:$0xff]
    %v1005 = vld [vmem:[%s6 + $0x148] sm:$0xff]
    %v1006 = vld [vmem:[%s6 + $0x150] sm:$0xff]
    %v1007 = vld [vmem:[%s6 + $0x158] sm:$0xff]
    %v1008 = vld [vmem:[%s6 + $0x160] sm:$0xff]
    %v1009 = vld [vmem:[%s6 + $0x168] sm:$0xff]
    %v1010 = vld [vmem:[%s6 + $0x170] sm:$0xff]
    %v1011 = vld [vmem:[%s6 + $0x178] sm:$0xff]
    %v1012 = vld [vmem:[%s6 + $0x180] sm:$0xff]
    %v1013 = vld [vmem:[%s6 + $0x188] sm:$0xff]
    %v1014 = vld [vmem:[%s6 + $0x190] sm:$0xff]
    %v1015 = vld [vmem:[%s6 + $0x198] sm:$0xff]
    %v1016 = vld [vmem:[%s6 + $0x1a0] sm:$0xff]
    %v1017 = vld [vmem:[%s6 + $0x1a8] sm:$0xff]
    %v1018 = vld [vmem:[%s6 + $0x1b0] sm:$0xff]
    %v1019 = vld [vmem:[%s6 + $0x1b8] sm:$0xff]
    %v1020 = vld [vmem:[%s6 + $0x1c0] sm:$0xff]
    %v1021 = vld [vmem:[%s6 + $0x1c8] sm:$0xff]
    %v1022 = vld [vmem:[%s6 + $0x1d0] sm:$0xff]
    %v1023 = vld [vmem:[%s6 + $0x1d8] sm:$0xff]
    %v1024 = vld [vmem:[%s6 + $0x1e0] sm:$0xff]
    %v1025 = vld [vmem:[%s6 + $0x1e8] sm:$0xff]
    %v1026 = vld [vmem:[%s6 + $0x1f0] sm:$0xff]
    %v1027 = vld [vmem:[%s6 + $0x1f8] sm:$0xff]
    %v1028 = vld [vmem:[%s6 + $0x200] sm:$0xff]
    %v1029 = vld [vmem:[%s6 + $0x208] sm:$0xff]
    %v1030 = vld [vmem:[%s6 + $0x210] sm:$0xff]
    %v1031 = vld [vmem:[%s6 + $0x218] sm:$0xff]
    %v1032 = vld [vmem:[%s6 + $0x220] sm:$0xff]
    %v1033 = vld [vmem:[%s6 + $0x228] sm:$0xff]
    %v1034 = vld [vmem:[%s6 + $0x230] sm:$0xff]
    %v1035 = vld [vmem:[%s6 + $0x238] sm:$0xff]
    %v1036 = vld [vmem:[%s6 + $0x240] sm:$0xff]
    %v1037 = vld [vmem:[%s6 + $0x248] sm:$0xff]
    %v1038 = vld [vmem:[%s6 + $0x250] sm:$0xff]
    %v1039 = vld [vmem:[%s6 + $0x258] sm:$0xff]
    %v1040 = vld [vmem:[%s6 + $0x260] sm:$0xff]
    %v1041 = vld [vmem:[%s6 + $0x268] sm:$0xff]
    %v1042 = vld [vmem:[%s6 + $0x270] sm:$0xff]
    %v1043 = vld [vmem:[%s6 + $0x278] sm:$0xff]
    %v1044 = vld [vmem:[%s6 + $0x280] sm:$0xff]
    %v1045 = vld [vmem:[%s6 + $0x288] sm:$0xff]
    %v1046 = vld [vmem:[%s6 + $0x290] sm:$0xff]
    %v1047 = vld [vmem:[%s6 + $0x298] sm:$0xff]
    %v1048 = vld [vmem:[%s6 + $0x2a0] sm:$0xff]
    %v1049 = vld [vmem:[%s6 + $0x2a8] sm:$0xff]
    %v1050 = vld [vmem:[%s6 + $0x2b0] sm:$0xff]
    %v1051 = vld [vmem:[%s6 + $0x2b8] sm:$0xff]
    %v1052 = vld [vmem:[%s6 + $0x2c0] sm:$0xff]
    %v1053 = vld [vmem:[%s6 + $0x2c8] sm:$0xff]
    %v1054 = vld [vmem:[%s6 + $0x2d0] sm:$0xff]
    %v1055 = vld [vmem:[%s6 + $0x2d8] sm:$0xff]
    %v1056 = vld [vmem:[%s6 + $0x2e0] sm:$0xff]
    %v1057 = vld [vmem:[%s6 + $0x2e8] sm:$0xff]
    %v1058 = vld [vmem:[%s6 + $0x2f0] sm:$0xff]
    %v1059 = vld [vmem:[%s6 + $0x2f8] sm:$0xff]
    %v1060 = vld [vmem:[%s7] sm:$0xff]
    %v1061 = vld [vmem:[%s7 + $0x8] sm:$0xff]
    %v1062 = vld [vmem:[%s7 + $0x10] sm:$0xff]
    %v1066 = vlaneseq
    %v1067 = vshrl.u32 %v1066, 7
    %v1068 = vsub.s32 0, %v1067
    %v1069 = vrot.slane %v1060, %v1068
    %v1070 = vlaneseq
    %v1071 = vshrl.u32 %v1070, 7
    %v1072 = vsub.s32 1, %v1071
    %v1073 = vrot.slane %v1060, %v1072
    %v1074 = vlaneseq
    %v1075 = vshrl.u32 %v1074, 7
    %v1076 = vsub.s32 2, %v1075
    %v1077 = vrot.slane %v1060, %v1076
    %v1078 = vlaneseq
    %v1079 = vshrl.u32 %v1078, 7
    %v1080 = vsub.s32 3, %v1079
    %v1081 = vrot.slane %v1060, %v1080
    %v1082 = vlaneseq
    %v1083 = vshrl.u32 %v1082, 7
    %v1084 = vsub.s32 4, %v1083
    %v1085 = vrot.slane %v1060, %v1084
    %v1086 = vlaneseq
    %v1087 = vshrl.u32 %v1086, 7
    %v1088 = vsub.s32 5, %v1087
    %v1089 = vrot.slane %v1060, %v1088
    %v1090 = vlaneseq
    %v1091 = vshrl.u32 %v1090, 7
    %v1092 = vsub.s32 6, %v1091
    %v1093 = vrot.slane %v1060, %v1092
    %v1094 = vlaneseq
    %v1095 = vshrl.u32 %v1094, 7
    %v1096 = vsub.s32 7, %v1095
    %v1097 = vrot.slane %v1060, %v1096
    %v1098 = vlaneseq
    %v1099 = vshrl.u32 %v1098, 7
    %v1100 = vsub.s32 0, %v1099
    %v1101 = vrot.slane %v1061, %v1100
    %v1102 = vlaneseq
    %v1103 = vshrl.u32 %v1102, 7
    %v1104 = vsub.s32 1, %v1103
    %v1105 = vrot.slane %v1061, %v1104
    %v1106 = vlaneseq
    %v1107 = vshrl.u32 %v1106, 7
    %v1108 = vsub.s32 2, %v1107
    %v1109 = vrot.slane %v1061, %v1108
    %v1110 = vlaneseq
    %v1111 = vshrl.u32 %v1110, 7
    %v1112 = vsub.s32 3, %v1111
    %v1113 = vrot.slane %v1061, %v1112
    %v1114 = vlaneseq
    %v1115 = vshrl.u32 %v1114, 7
    %v1116 = vsub.s32 4, %v1115
    %v1117 = vrot.slane %v1061, %v1116
    %v1118 = vlaneseq
    %v1119 = vshrl.u32 %v1118, 7
    %v1120 = vsub.s32 5, %v1119
    %v1121 = vrot.slane %v1061, %v1120
    %v1122 = vlaneseq
    %v1123 = vshrl.u32 %v1122, 7
    %v1124 = vsub.s32 6, %v1123
    %v1125 = vrot.slane %v1061, %v1124
    %v1126 = vlaneseq
    %v1127 = vshrl.u32 %v1126, 7
    %v1128 = vsub.s32 7, %v1127
    %v1129 = vrot.slane %v1061, %v1128
    %v1130 = vlaneseq
    %v1131 = vshrl.u32 %v1130, 7
    %v1132 = vsub.s32 0, %v1131
    %v1133 = vrot.slane %v1062, %v1132
    %v1134 = vlaneseq
    %v1135 = vshrl.u32 %v1134, 7
    %v1136 = vsub.s32 1, %v1135
    %v1137 = vrot.slane %v1062, %v1136
    %v1138 = vlaneseq
    %v1139 = vshrl.u32 %v1138, 7
    %v1140 = vsub.s32 2, %v1139
    %v1141 = vrot.slane %v1062, %v1140
    %v1142 = vlaneseq
    %v1143 = vshrl.u32 %v1142, 7
    %v1144 = vsub.s32 3, %v1143
    %v1145 = vrot.slane %v1062, %v1144
    %v1146 = vlaneseq
    %v1147 = vshrl.u32 %v1146, 7
    %v1148 = vsub.s32 4, %v1147
    %v1149 = vrot.slane %v1062, %v1148
    %v1150 = vlaneseq
    %v1151 = vshrl.u32 %v1150, 7
    %v1152 = vsub.s32 5, %v1151
    %v1153 = vrot.slane %v1062, %v1152
    %v1154 = vlaneseq
    %v1155 = vshrl.u32 %v1154, 7
    %v1156 = vsub.s32 6, %v1155
    %v1157 = vrot.slane %v1062, %v1156
    %v1158 = vlaneseq
    %v1159 = vshrl.u32 %v1158, 7
    %v1160 = vsub.s32 7, %v1159
    %v1161 = vrot.slane %v1062, %v1160
    %v1282 = vunpack.c.l.b16 %v964
    %v1283 = vunpack.c.h.b16 %v964
    %v1284 = vunpack.c.l.b16 %v965
    %v1285 = vunpack.c.h.b16 %v965
    %v1286 = vunpack.c.l.b16 %v966
    %v1287 = vunpack.c.h.b16 %v966
    %v1288 = vunpack.c.l.b16 %v967
    %v1289 = vunpack.c.h.b16 %v967
    %v1290 = vunpack.c.l.b16 %v968
    %v1291 = vunpack.c.h.b16 %v968
    %v1292 = vunpack.c.l.b16 %v969
    %v1293 = vunpack.c.h.b16 %v969
    %v1294 = vunpack.c.l.b16 %v970
    %v1295 = vunpack.c.h.b16 %v970
    %v1296 = vunpack.c.l.b16 %v971
    %v1297 = vunpack.c.h.b16 %v971
    %v1298 = vunpack.c.l.b16 %v972
    %v1299 = vunpack.c.h.b16 %v972
    %v1300 = vunpack.c.l.b16 %v973
    %v1301 = vunpack.c.h.b16 %v973
    %v1302 = vunpack.c.l.b16 %v974
    %v1303 = vunpack.c.h.b16 %v974
    %v1304 = vunpack.c.l.b16 %v975
    %v1305 = vunpack.c.h.b16 %v975
    %v1306 = vunpack.c.l.b16 %v976
    %v1307 = vunpack.c.h.b16 %v976
    %v1308 = vunpack.c.l.b16 %v977
    %v1309 = vunpack.c.h.b16 %v977
    %v1310 = vunpack.c.l.b16 %v978
    %v1311 = vunpack.c.h.b16 %v978
    %v1312 = vunpack.c.l.b16 %v979
    %v1313 = vunpack.c.h.b16 %v979
    %v1314 = vunpack.c.l.b16 %v980
    %v1315 = vunpack.c.h.b16 %v980
    %v1316 = vunpack.c.l.b16 %v981
    %v1317 = vunpack.c.h.b16 %v981
    %v1318 = vunpack.c.l.b16 %v982
    %v1319 = vunpack.c.h.b16 %v982
    %v1320 = vunpack.c.l.b16 %v983
    %v1321 = vunpack.c.h.b16 %v983
    %v1322 = vunpack.c.l.b16 %v984
    %v1323 = vunpack.c.h.b16 %v984
    %v1324 = vunpack.c.l.b16 %v985
    %v1325 = vunpack.c.h.b16 %v985
    %v1326 = vunpack.c.l.b16 %v986
    %v1327 = vunpack.c.h.b16 %v986
    %v1328 = vunpack.c.l.b16 %v987
    %v1329 = vunpack.c.h.b16 %v987
    %v1330 = vunpack.c.l.b16 %v988
    %v1331 = vunpack.c.h.b16 %v988
    %v1332 = vunpack.c.l.b16 %v989
    %v1333 = vunpack.c.h.b16 %v989
    %v1334 = vunpack.c.l.b16 %v990
    %v1335 = vunpack.c.h.b16 %v990
    %v1336 = vunpack.c.l.b16 %v991
    %v1337 = vunpack.c.h.b16 %v991
    %v1338 = vunpack.c.l.b16 %v992
    %v1339 = vunpack.c.h.b16 %v992
    %v1340 = vunpack.c.l.b16 %v993
    %v1341 = vunpack.c.h.b16 %v993
    %v1342 = vunpack.c.l.b16 %v994
    %v1343 = vunpack.c.h.b16 %v994
    %v1344 = vunpack.c.l.b16 %v995
    %v1345 = vunpack.c.h.b16 %v995
    %v1346 = vunpack.c.l.b16 %v996
    %v1347 = vunpack.c.h.b16 %v996
    %v1348 = vunpack.c.l.b16 %v997
    %v1349 = vunpack.c.h.b16 %v997
    %v1350 = vunpack.c.l.b16 %v998
    %v1351 = vunpack.c.h.b16 %v998
    %v1352 = vunpack.c.l.b16 %v999
    %v1353 = vunpack.c.h.b16 %v999
    %v1354 = vunpack.c.l.b16 %v1000
    %v1355 = vunpack.c.h.b16 %v1000
    %v1356 = vunpack.c.l.b16 %v1001
    %v1357 = vunpack.c.h.b16 %v1001
    %v1358 = vunpack.c.l.b16 %v1002
    %v1359 = vunpack.c.h.b16 %v1002
    %v1360 = vunpack.c.l.b16 %v1003
    %v1361 = vunpack.c.h.b16 %v1003
    %v1362 = vunpack.c.l.b16 %v1004
    %v1363 = vunpack.c.h.b16 %v1004
    %v1364 = vunpack.c.l.b16 %v1005
    %v1365 = vunpack.c.h.b16 %v1005
    %v1366 = vunpack.c.l.b16 %v1006
    %v1367 = vunpack.c.h.b16 %v1006
    %v1368 = vunpack.c.l.b16 %v1007
    %v1369 = vunpack.c.h.b16 %v1007
    %v1370 = vunpack.c.l.b16 %v1008
    %v1371 = vunpack.c.h.b16 %v1008
    %v1372 = vunpack.c.l.b16 %v1009
    %v1373 = vunpack.c.h.b16 %v1009
    %v1374 = vunpack.c.l.b16 %v1010
    %v1375 = vunpack.c.h.b16 %v1010
    %v1376 = vunpack.c.l.b16 %v1011
    %v1377 = vunpack.c.h.b16 %v1011
    %v1378 = vunpack.c.l.b16 %v1012
    %v1379 = vunpack.c.h.b16 %v1012
    %v1380 = vunpack.c.l.b16 %v1013
    %v1381 = vunpack.c.h.b16 %v1013
    %v1382 = vunpack.c.l.b16 %v1014
    %v1383 = vunpack.c.h.b16 %v1014
    %v1384 = vunpack.c.l.b16 %v1015
    %v1385 = vunpack.c.h.b16 %v1015
    %v1386 = vunpack.c.l.b16 %v1016
    %v1387 = vunpack.c.h.b16 %v1016
    %v1388 = vunpack.c.l.b16 %v1017
    %v1389 = vunpack.c.h.b16 %v1017
    %v1390 = vunpack.c.l.b16 %v1018
    %v1391 = vunpack.c.h.b16 %v1018
    %v1392 = vunpack.c.l.b16 %v1019
    %v1393 = vunpack.c.h.b16 %v1019
    %v1394 = vunpack.c.l.b16 %v1020
    %v1395 = vunpack.c.h.b16 %v1020
    %v1396 = vunpack.c.l.b16 %v1021
    %v1397 = vunpack.c.h.b16 %v1021
    %v1398 = vunpack.c.l.b16 %v1022
    %v1399 = vunpack.c.h.b16 %v1022
    %v1400 = vunpack.c.l.b16 %v1023
    %v1401 = vunpack.c.h.b16 %v1023
    %v1402 = vunpack.c.l.b16 %v1024
    %v1403 = vunpack.c.h.b16 %v1024
    %v1404 = vunpack.c.l.b16 %v1025
    %v1405 = vunpack.c.h.b16 %v1025
    %v1406 = vunpack.c.l.b16 %v1026
    %v1407 = vunpack.c.h.b16 %v1026
    %v1408 = vunpack.c.l.b16 %v1027
    %v1409 = vunpack.c.h.b16 %v1027
    %v1410 = vunpack.c.l.b16 %v1028
    %v1411 = vunpack.c.h.b16 %v1028
    %v1412 = vunpack.c.l.b16 %v1029
    %v1413 = vunpack.c.h.b16 %v1029
    %v1414 = vunpack.c.l.b16 %v1030
    %v1415 = vunpack.c.h.b16 %v1030
    %v1416 = vunpack.c.l.b16 %v1031
    %v1417 = vunpack.c.h.b16 %v1031
    %v1418 = vunpack.c.l.b16 %v1032
    %v1419 = vunpack.c.h.b16 %v1032
    %v1420 = vunpack.c.l.b16 %v1033
    %v1421 = vunpack.c.h.b16 %v1033
    %v1422 = vunpack.c.l.b16 %v1034
    %v1423 = vunpack.c.h.b16 %v1034
    %v1424 = vunpack.c.l.b16 %v1035
    %v1425 = vunpack.c.h.b16 %v1035
    %v1426 = vunpack.c.l.b16 %v1036
    %v1427 = vunpack.c.h.b16 %v1036
    %v1428 = vunpack.c.l.b16 %v1037
    %v1429 = vunpack.c.h.b16 %v1037
    %v1430 = vunpack.c.l.b16 %v1038
    %v1431 = vunpack.c.h.b16 %v1038
    %v1432 = vunpack.c.l.b16 %v1039
    %v1433 = vunpack.c.h.b16 %v1039
    %v1434 = vunpack.c.l.b16 %v1040
    %v1435 = vunpack.c.h.b16 %v1040
    %v1436 = vunpack.c.l.b16 %v1041
    %v1437 = vunpack.c.h.b16 %v1041
    %v1438 = vunpack.c.l.b16 %v1042
    %v1439 = vunpack.c.h.b16 %v1042
    %v1440 = vunpack.c.l.b16 %v1043
    %v1441 = vunpack.c.h.b16 %v1043
    %v1442 = vunpack.c.l.b16 %v1044
    %v1443 = vunpack.c.h.b16 %v1044
    %v1444 = vunpack.c.l.b16 %v1045
    %v1445 = vunpack.c.h.b16 %v1045
    %v1446 = vunpack.c.l.b16 %v1046
    %v1447 = vunpack.c.h.b16 %v1046
    %v1448 = vunpack.c.l.b16 %v1047
    %v1449 = vunpack.c.h.b16 %v1047
    %v1450 = vunpack.c.l.b16 %v1048
    %v1451 = vunpack.c.h.b16 %v1048
    %v1452 = vunpack.c.l.b16 %v1049
    %v1453 = vunpack.c.h.b16 %v1049
    %v1454 = vunpack.c.l.b16 %v1050
    %v1455 = vunpack.c.h.b16 %v1050
    %v1456 = vunpack.c.l.b16 %v1051
    %v1457 = vunpack.c.h.b16 %v1051
    %v1458 = vunpack.c.l.b16 %v1052
    %v1459 = vunpack.c.h.b16 %v1052
    %v1460 = vunpack.c.l.b16 %v1053
    %v1461 = vunpack.c.h.b16 %v1053
    %v1462 = vunpack.c.l.b16 %v1054
    %v1463 = vunpack.c.h.b16 %v1054
    %v1464 = vunpack.c.l.b16 %v1055
    %v1465 = vunpack.c.h.b16 %v1055
    %v1466 = vunpack.c.l.b16 %v1056
    %v1467 = vunpack.c.h.b16 %v1056
    %v1468 = vunpack.c.l.b16 %v1057
    %v1469 = vunpack.c.h.b16 %v1057
    %v1470 = vunpack.c.l.b16 %v1058
    %v1471 = vunpack.c.h.b16 %v1058
    %v1472 = vunpack.c.l.b16 %v1059
    %v1473 = vunpack.c.h.b16 %v1059
    %v1474 = vpack.c.b16 %v1306, %v1282
    %v1475 = vpack.c.b16 %v1307, %v1283
    %v1476 = vpack.c.b16 %v1308, %v1284
    %v1477 = vpack.c.b16 %v1309, %v1285
    %v1478 = vpack.c.b16 %v1310, %v1286
    %v1479 = vpack.c.b16 %v1311, %v1287
    %v1480 = vpack.c.b16 %v1312, %v1288
    %v1481 = vpack.c.b16 %v1313, %v1289
    %v1482 = vpack.c.b16 %v1314, %v1290
    %v1483 = vpack.c.b16 %v1315, %v1291
    %v1484 = vpack.c.b16 %v1316, %v1292
    %v1485 = vpack.c.b16 %v1317, %v1293
    %v1486 = vpack.c.b16 %v1318, %v1294
    %v1487 = vpack.c.b16 %v1319, %v1295
    %v1488 = vpack.c.b16 %v1320, %v1296
    %v1489 = vpack.c.b16 %v1321, %v1297
    %v1490 = vpack.c.b16 %v1322, %v1298
    %v1491 = vpack.c.b16 %v1323, %v1299
    %v1492 = vpack.c.b16 %v1324, %v1300
    %v1493 = vpack.c.b16 %v1325, %v1301
    %v1494 = vpack.c.b16 %v1326, %v1302
    %v1495 = vpack.c.b16 %v1327, %v1303
    %v1496 = vpack.c.b16 %v1328, %v1304
    %v1497 = vpack.c.b16 %v1329, %v1305
    %v1498 = vpack.c.b16 %v1354, %v1330
    %v1499 = vpack.c.b16 %v1355, %v1331
    %v1500 = vpack.c.b16 %v1356, %v1332
    %v1501 = vpack.c.b16 %v1357, %v1333
    %v1502 = vpack.c.b16 %v1358, %v1334
    %v1503 = vpack.c.b16 %v1359, %v1335
    %v1504 = vpack.c.b16 %v1360, %v1336
    %v1505 = vpack.c.b16 %v1361, %v1337
    %v1506 = vpack.c.b16 %v1362, %v1338
    %v1507 = vpack.c.b16 %v1363, %v1339
    %v1508 = vpack.c.b16 %v1364, %v1340
    %v1509 = vpack.c.b16 %v1365, %v1341
    %v1510 = vpack.c.b16 %v1366, %v1342
    %v1511 = vpack.c.b16 %v1367, %v1343
    %v1512 = vpack.c.b16 %v1368, %v1344
    %v1513 = vpack.c.b16 %v1369, %v1345
    %v1514 = vpack.c.b16 %v1370, %v1346
    %v1515 = vpack.c.b16 %v1371, %v1347
    %v1516 = vpack.c.b16 %v1372, %v1348
    %v1517 = vpack.c.b16 %v1373, %v1349
    %v1518 = vpack.c.b16 %v1374, %v1350
    %v1519 = vpack.c.b16 %v1375, %v1351
    %v1520 = vpack.c.b16 %v1376, %v1352
    %v1521 = vpack.c.b16 %v1377, %v1353
    %v1522 = vpack.c.b16 %v1402, %v1378
    %v1523 = vpack.c.b16 %v1403, %v1379
    %v1524 = vpack.c.b16 %v1404, %v1380
    %v1525 = vpack.c.b16 %v1405, %v1381
    %v1526 = vpack.c.b16 %v1406, %v1382
    %v1527 = vpack.c.b16 %v1407, %v1383
    %v1528 = vpack.c.b16 %v1408, %v1384
    %v1529 = vpack.c.b16 %v1409, %v1385
    %v1530 = vpack.c.b16 %v1410, %v1386
    %v1531 = vpack.c.b16 %v1411, %v1387
    %v1532 = vpack.c.b16 %v1412, %v1388
    %v1533 = vpack.c.b16 %v1413, %v1389
    %v1534 = vpack.c.b16 %v1414, %v1390
    %v1535 = vpack.c.b16 %v1415, %v1391
    %v1536 = vpack.c.b16 %v1416, %v1392
    %v1537 = vpack.c.b16 %v1417, %v1393
    %v1538 = vpack.c.b16 %v1418, %v1394
    %v1539 = vpack.c.b16 %v1419, %v1395
    %v1540 = vpack.c.b16 %v1420, %v1396
    %v1541 = vpack.c.b16 %v1421, %v1397
    %v1542 = vpack.c.b16 %v1422, %v1398
    %v1543 = vpack.c.b16 %v1423, %v1399
    %v1544 = vpack.c.b16 %v1424, %v1400
    %v1545 = vpack.c.b16 %v1425, %v1401
    %v1546 = vpack.c.b16 %v1450, %v1426
    %v1547 = vpack.c.b16 %v1451, %v1427
    %v1548 = vpack.c.b16 %v1452, %v1428
    %v1549 = vpack.c.b16 %v1453, %v1429
    %v1550 = vpack.c.b16 %v1454, %v1430
    %v1551 = vpack.c.b16 %v1455, %v1431
    %v1552 = vpack.c.b16 %v1456, %v1432
    %v1553 = vpack.c.b16 %v1457, %v1433
    %v1554 = vpack.c.b16 %v1458, %v1434
    %v1555 = vpack.c.b16 %v1459, %v1435
    %v1556 = vpack.c.b16 %v1460, %v1436
    %v1557 = vpack.c.b16 %v1461, %v1437
    %v1558 = vpack.c.b16 %v1462, %v1438
    %v1559 = vpack.c.b16 %v1463, %v1439
    %v1560 = vpack.c.b16 %v1464, %v1440
    %v1561 = vpack.c.b16 %v1465, %v1441
    %v1562 = vpack.c.b16 %v1466, %v1442
    %v1563 = vpack.c.b16 %v1467, %v1443
    %v1564 = vpack.c.b16 %v1468, %v1444
    %v1565 = vpack.c.b16 %v1469, %v1445
    %v1566 = vpack.c.b16 %v1470, %v1446
    %v1567 = vpack.c.b16 %v1471, %v1447
    %v1568 = vpack.c.b16 %v1472, %v1448
    %v1569 = vpack.c.b16 %v1473, %v1449
    %v1667 = vsel %vm730, %v963, 0
    %1669 = vmatprep.subr.bf16.mxu0 %v1475
    %1670 = vmatpush1.bf16.msra.mxu0 %v1474
    %1671 = vmatprep.subr.bf16.mxu0 %v1499
    %1672 = vmatpush1.bf16.msra.mxu0 %v1498
    %1673 = vmatprep.subr.bf16.mxu0 %v1523
    %1674 = vmatpush1.bf16.msra.mxu0 %v1522
    %1675 = vmatprep.subr.bf16.mxu0 %v1547
    %1676 = vmatpush1.bf16.msra.mxu0 %v1546
    %1677 = vmatprep.subr.bf16.mxu0 0
    %1678 = vmatpush1.bf16.msra.mxu0 0
    %1679 = vmatprep.subr.bf16.mxu0 0
    %1680 = vmatpush1.bf16.msra.mxu0 0
    %1681 = vmatprep.subr.bf16.mxu0 0
    %1682 = vmatpush1.bf16.msra.mxu0 0
    %1683 = vmatprep.subr.bf16.mxu0 0
    %1684 = vmatpush1.bf16.msra.mxu0 0
    %1685 = vmatprep.subr.bf16.mxu0 0
    %1686 = vmatpush1.bf16.msra.mxu0 0
    %1687 = vmatprep.subr.bf16.mxu0 0
    %1688 = vmatpush1.bf16.msra.mxu0 0
    %1689 = vmatprep.subr.bf16.mxu0 0
    %1690 = vmatpush1.bf16.msra.mxu0 0
    %1691 = vmatprep.subr.bf16.mxu0 0
    %1692 = vmatpush1.bf16.msra.mxu0 0
    %1693 = vmatprep.subr.bf16.mxu0 0
    %1694 = vmatpush1.bf16.msra.mxu0 0
    %1695 = vmatprep.subr.bf16.mxu0 0
    %1696 = vmatpush1.bf16.msra.mxu0 0
    %1697 = vmatprep.subr.bf16.mxu0 0
    %1698 = vmatpush1.bf16.msra.mxu0 0
    %1699 = vmatprep.subr.bf16.mxu0 0
    %1700 = vmatpush1.bf16.msra.mxu0 0
    %1701 = vmatprep.mubr.bf16.mxu0 0
    %1702 = vmatmul.mubr.bf16.gmra.mrb[0].mxu0 %v1667
    %v1703 = vpop.f32.mrb[0].mxu0
    %v1704 = vadd.f32 %v1069, %v1703
    %v1705 = vpop.f32.mrb[0].mxu0
    %v1706 = vadd.f32 %v1073, %v1705
    %v1707 = vpop.f32.mrb[0].mxu0
    %v1708 = vpop.f32.mrb[0].mxu0
    %1709 = vdwg.mxu0
    %1710 = vmatprep.subr.bf16.mxu0 %v1477
    %1711 = vmatpush1.bf16.msra.mxu0 %v1476
    %1712 = vmatprep.subr.bf16.mxu0 %v1501
    %1713 = vmatpush1.bf16.msra.mxu0 %v1500
    %1714 = vmatprep.subr.bf16.mxu0 %v1525
    %1715 = vmatpush1.bf16.msra.mxu0 %v1524
    %1716 = vmatprep.subr.bf16.mxu0 %v1549
    %1717 = vmatpush1.bf16.msra.mxu0 %v1548
    %1718 = vmatprep.subr.bf16.mxu0 0
    %1719 = vmatpush1.bf16.msra.mxu0 0
    %1720 = vmatprep.subr.bf16.mxu0 0
    %1721 = vmatpush1.bf16.msra.mxu0 0
    %1722 = vmatprep.subr.bf16.mxu0 0
    %1723 = vmatpush1.bf16.msra.mxu0 0
    %1724 = vmatprep.subr.bf16.mxu0 0
    %1725 = vmatpush1.bf16.msra.mxu0 0
    %1726 = vmatprep.subr.bf16.mxu0 0
    %1727 = vmatpush1.bf16.msra.mxu0 0
    %1728 = vmatprep.subr.bf16.mxu0 0
    %1729 = vmatpush1.bf16.msra.mxu0 0
    %1730 = vmatprep.subr.bf16.mxu0 0
    %1731 = vmatpush1.bf16.msra.mxu0 0
    %1732 = vmatprep.subr.bf16.mxu0 0
    %1733 = vmatpush1.bf16.msra.mxu0 0
    %1734 = vmatprep.subr.bf16.mxu0 0
    %1735 = vmatpush1.bf16.msra.mxu0 0
    %1736 = vmatprep.subr.bf16.mxu0 0
    %1737 = vmatpush1.bf16.msra.mxu0 0
    %1738 = vmatprep.subr.bf16.mxu0 0
    %1739 = vmatpush1.bf16.msra.mxu0 0
    %1740 = vmatprep.subr.bf16.mxu0 0
    %1741 = vmatpush1.bf16.msra.mxu0 0
    %1742 = vmatprep.mubr.bf16.mxu0 0
    %1743 = vmatmul.mubr.bf16.gmra.mrb[0].mxu0 %v1667
    %v1744 = vpop.f32.mrb[0].mxu0
    %v1745 = vadd.f32 %v1077, %v1744
    %v1746 = vpop.f32.mrb[0].mxu0
    %v1747 = vadd.f32 %v1081, %v1746
    %v1748 = vpop.f32.mrb[0].mxu0
    %v1749 = vpop.f32.mrb[0].mxu0
    %1750 = vdwg.mxu0
    %1751 = vmatprep.subr.bf16.mxu0 %v1479
    %1752 = vmatpush1.bf16.msra.mxu0 %v1478
    %1753 = vmatprep.subr.bf16.mxu0 %v1503
    %1754 = vmatpush1.bf16.msra.mxu0 %v1502
    %1755 = vmatprep.subr.bf16.mxu0 %v1527
    %1756 = vmatpush1.bf16.msra.mxu0 %v1526
    %1757 = vmatprep.subr.bf16.mxu0 %v1551
    %1758 = vmatpush1.bf16.msra.mxu0 %v1550
    %1759 = vmatprep.subr.bf16.mxu0 0
    %1760 = vmatpush1.bf16.msra.mxu0 0
    %1761 = vmatprep.subr.bf16.mxu0 0
    %1762 = vmatpush1.bf16.msra.mxu0 0
    %1763 = vmatprep.subr.bf16.mxu0 0
    %1764 = vmatpush1.bf16.msra.mxu0 0
    %1765 = vmatprep.subr.bf16.mxu0 0
    %1766 = vmatpush1.bf16.msra.mxu0 0
    %1767 = vmatprep.subr.bf16.mxu0 0
    %1768 = vmatpush1.bf16.msra.mxu0 0
    %1769 = vmatprep.subr.bf16.mxu0 0
    %1770 = vmatpush1.bf16.msra.mxu0 0
    %1771 = vmatprep.subr.bf16.mxu0 0
    %1772 = vmatpush1.bf16.msra.mxu0 0
    %1773 = vmatprep.subr.bf16.mxu0 0
    %1774 = vmatpush1.bf16.msra.mxu0 0
    %1775 = vmatprep.subr.bf16.mxu0 0
    %1776 = vmatpush1.bf16.msra.mxu0 0
    %1777 = vmatprep.subr.bf16.mxu0 0
    %1778 = vmatpush1.bf16.msra.mxu0 0
    %1779 = vmatprep.subr.bf16.mxu0 0
    %1780 = vmatpush1.bf16.msra.mxu0 0
    %1781 = vmatprep.subr.bf16.mxu0 0
    %1782 = vmatpush1.bf16.msra.mxu0 0
    %1783 = vmatprep.mubr.bf16.mxu0 0
    %1784 = vmatmul.mubr.bf16.gmra.mrb[0].mxu0 %v1667
    %v1785 = vpop.f32.mrb[0].mxu0
    %v1786 = vadd.f32 %v1085, %v1785
    %v1787 = vpop.f32.mrb[0].mxu0
    %v1788 = vadd.f32 %v1089, %v1787
    %v1789 = vpop.f32.mrb[0].mxu0
    %v1790 = vpop.f32.mrb[0].mxu0
    %1791 = vdwg.mxu0
    %1792 = vmatprep.subr.bf16.mxu0 %v1481
    %1793 = vmatpush1.bf16.msra.mxu0 %v1480
    %1794 = vmatprep.subr.bf16.mxu0 %v1505
    %1795 = vmatpush1.bf16.msra.mxu0 %v1504
    %1796 = vmatprep.subr.bf16.mxu0 %v1529
    %1797 = vmatpush1.bf16.msra.mxu0 %v1528
    %1798 = vmatprep.subr.bf16.mxu0 %v1553
    %1799 = vmatpush1.bf16.msra.mxu0 %v1552
    %1800 = vmatprep.subr.bf16.mxu0 0
    %1801 = vmatpush1.bf16.msra.mxu0 0
    %1802 = vmatprep.subr.bf16.mxu0 0
    %1803 = vmatpush1.bf16.msra.mxu0 0
    %1804 = vmatprep.subr.bf16.mxu0 0
    %1805 = vmatpush1.bf16.msra.mxu0 0
    %1806 = vmatprep.subr.bf16.mxu0 0
    %1807 = vmatpush1.bf16.msra.mxu0 0
    %1808 = vmatprep.subr.bf16.mxu0 0
    %1809 = vmatpush1.bf16.msra.mxu0 0
    %1810 = vmatprep.subr.bf16.mxu0 0
    %1811 = vmatpush1.bf16.msra.mxu0 0
    %1812 = vmatprep.subr.bf16.mxu0 0
    %1813 = vmatpush1.bf16.msra.mxu0 0
    %1814 = vmatprep.subr.bf16.mxu0 0
    %1815 = vmatpush1.bf16.msra.mxu0 0
    %1816 = vmatprep.subr.bf16.mxu0 0
    %1817 = vmatpush1.bf16.msra.mxu0 0
    %1818 = vmatprep.subr.bf16.mxu0 0
    %1819 = vmatpush1.bf16.msra.mxu0 0
    %1820 = vmatprep.subr.bf16.mxu0 0
    %1821 = vmatpush1.bf16.msra.mxu0 0
    %1822 = vmatprep.subr.bf16.mxu0 0
    %1823 = vmatpush1.bf16.msra.mxu0 0
    %1824 = vmatprep.mubr.bf16.mxu0 0
    %1825 = vmatmul.mubr.bf16.gmra.mrb[0].mxu0 %v1667
    %v1826 = vpop.f32.mrb[0].mxu0
    %v1827 = vadd.f32 %v1093, %v1826
    %v1828 = vpop.f32.mrb[0].mxu0
    %v1829 = vadd.f32 %v1097, %v1828
    %v1830 = vpop.f32.mrb[0].mxu0
    %v1831 = vpop.f32.mrb[0].mxu0
    %1832 = vdwg.mxu0
    %1833 = vmatprep.subr.bf16.mxu0 %v1483
    %1834 = vmatpush1.bf16.msra.mxu0 %v1482
    %1835 = vmatprep.subr.bf16.mxu0 %v1507
    %1836 = vmatpush1.bf16.msra.mxu0 %v1506
    %1837 = vmatprep.subr.bf16.mxu0 %v1531
    %1838 = vmatpush1.bf16.msra.mxu0 %v1530
    %1839 = vmatprep.subr.bf16.mxu0 %v1555
    %1840 = vmatpush1.bf16.msra.mxu0 %v1554
    %1841 = vmatprep.subr.bf16.mxu0 0
    %1842 = vmatpush1.bf16.msra.mxu0 0
    %1843 = vmatprep.subr.bf16.mxu0 0
    %1844 = vmatpush1.bf16.msra.mxu0 0
    %1845 = vmatprep.subr.bf16.mxu0 0
    %1846 = vmatpush1.bf16.msra.mxu0 0
    %1847 = vmatprep.subr.bf16.mxu0 0
    %1848 = vmatpush1.bf16.msra.mxu0 0
    %1849 = vmatprep.subr.bf16.mxu0 0
    %1850 = vmatpush1.bf16.msra.mxu0 0
    %1851 = vmatprep.subr.bf16.mxu0 0
    %1852 = vmatpush1.bf16.msra.mxu0 0
    %1853 = vmatprep.subr.bf16.mxu0 0
    %1854 = vmatpush1.bf16.msra.mxu0 0
    %1855 = vmatprep.subr.bf16.mxu0 0
    %1856 = vmatpush1.bf16.msra.mxu0 0
    %1857 = vmatprep.subr.bf16.mxu0 0
    %1858 = vmatpush1.bf16.msra.mxu0 0
    %1859 = vmatprep.subr.bf16.mxu0 0
    %1860 = vmatpush1.bf16.msra.mxu0 0
    %1861 = vmatprep.subr.bf16.mxu0 0
    %1862 = vmatpush1.bf16.msra.mxu0 0
    %1863 = vmatprep.subr.bf16.mxu0 0
    %1864 = vmatpush1.bf16.msra.mxu0 0
    %1865 = vmatprep.mubr.bf16.mxu0 0
    %1866 = vmatmul.mubr.bf16.gmra.mrb[0].mxu0 %v1667
    %v1867 = vpop.f32.mrb[0].mxu0
    %v1868 = vadd.f32 %v1101, %v1867
    %v1869 = vpop.f32.mrb[0].mxu0
    %v1870 = vadd.f32 %v1105, %v1869
    %v1871 = vpop.f32.mrb[0].mxu0
    %v1872 = vpop.f32.mrb[0].mxu0
    %1873 = vdwg.mxu0
    %1874 = vmatprep.subr.bf16.mxu0 %v1485
    %1875 = vmatpush1.bf16.msra.mxu0 %v1484
    %1876 = vmatprep.subr.bf16.mxu0 %v1509
    %1877 = vmatpush1.bf16.msra.mxu0 %v1508
    %1878 = vmatprep.subr.bf16.mxu0 %v1533
    %1879 = vmatpush1.bf16.msra.mxu0 %v1532
    %1880 = vmatprep.subr.bf16.mxu0 %v1557
    %1881 = vmatpush1.bf16.msra.mxu0 %v1556
    %1882 = vmatprep.subr.bf16.mxu0 0
    %1883 = vmatpush1.bf16.msra.mxu0 0
    %1884 = vmatprep.subr.bf16.mxu0 0
    %1885 = vmatpush1.bf16.msra.mxu0 0
    %1886 = vmatprep.subr.bf16.mxu0 0
    %1887 = vmatpush1.bf16.msra.mxu0 0
    %1888 = vmatprep.subr.bf16.mxu0 0
    %1889 = vmatpush1.bf16.msra.mxu0 0
    %1890 = vmatprep.subr.bf16.mxu0 0
    %1891 = vmatpush1.bf16.msra.mxu0 0
    %1892 = vmatprep.subr.bf16.mxu0 0
    %1893 = vmatpush1.bf16.msra.mxu0 0
    %1894 = vmatprep.subr.bf16.mxu0 0
    %1895 = vmatpush1.bf16.msra.mxu0 0
    %1896 = vmatprep.subr.bf16.mxu0 0
    %1897 = vmatpush1.bf16.msra.mxu0 0
    %1898 = vmatprep.subr.bf16.mxu0 0
    %1899 = vmatpush1.bf16.msra.mxu0 0
    %1900 = vmatprep.subr.bf16.mxu0 0
    %1901 = vmatpush1.bf16.msra.mxu0 0
    %1902 = vmatprep.subr.bf16.mxu0 0
    %1903 = vmatpush1.bf16.msra.mxu0 0
    %1904 = vmatprep.subr.bf16.mxu0 0
    %1905 = vmatpush1.bf16.msra.mxu0 0
    %1906 = vmatprep.mubr.bf16.mxu0 0
    %1907 = vmatmul.mubr.bf16.gmra.mrb[0].mxu0 %v1667
    %v1908 = vpop.f32.mrb[0].mxu0
    %v1909 = vadd.f32 %v1109, %v1908
    %v1910 = vpop.f32.mrb[0].mxu0
    %v1911 = vadd.f32 %v1113, %v1910
    %v1912 = vpop.f32.mrb[0].mxu0
    %v1913 = vpop.f32.mrb[0].mxu0
    %1914 = vdwg.mxu0
    %1915 = vmatprep.subr.bf16.mxu0 %v1487
    %1916 = vmatpush1.bf16.msra.mxu0 %v1486
    %1917 = vmatprep.subr.bf16.mxu0 %v1511
    %1918 = vmatpush1.bf16.msra.mxu0 %v1510
    %1919 = vmatprep.subr.bf16.mxu0 %v1535
    %1920 = vmatpush1.bf16.msra.mxu0 %v1534
    %1921 = vmatprep.subr.bf16.mxu0 %v1559
    %1922 = vmatpush1.bf16.msra.mxu0 %v1558
    %1923 = vmatprep.subr.bf16.mxu0 0
    %1924 = vmatpush1.bf16.msra.mxu0 0
    %1925 = vmatprep.subr.bf16.mxu0 0
    %1926 = vmatpush1.bf16.msra.mxu0 0
    %1927 = vmatprep.subr.bf16.mxu0 0
    %1928 = vmatpush1.bf16.msra.mxu0 0
    %1929 = vmatprep.subr.bf16.mxu0 0
    %1930 = vmatpush1.bf16.msra.mxu0 0
    %1931 = vmatprep.subr.bf16.mxu0 0
    %1932 = vmatpush1.bf16.msra.mxu0 0
    %1933 = vmatprep.subr.bf16.mxu0 0
    %1934 = vmatpush1.bf16.msra.mxu0 0
    %1935 = vmatprep.subr.bf16.mxu0 0
    %1936 = vmatpush1.bf16.msra.mxu0 0
    %1937 = vmatprep.subr.bf16.mxu0 0
    %1938 = vmatpush1.bf16.msra.mxu0 0
    %1939 = vmatprep.subr.bf16.mxu0 0
    %1940 = vmatpush1.bf16.msra.mxu0 0
    %1941 = vmatprep.subr.bf16.mxu0 0
    %1942 = vmatpush1.bf16.msra.mxu0 0
    %1943 = vmatprep.subr.bf16.mxu0 0
    %1944 = vmatpush1.bf16.msra.mxu0 0
    %1945 = vmatprep.subr.bf16.mxu0 0
    %1946 = vmatpush1.bf16.msra.mxu0 0
    %1947 = vmatprep.mubr.bf16.mxu0 0
    %1948 = vmatmul.mubr.bf16.gmra.mrb[0].mxu0 %v1667
    %v1949 = vpop.f32.mrb[0].mxu0
    %v1950 = vadd.f32 %v1117, %v1949
    %v1951 = vpop.f32.mrb[0].mxu0
    %v1952 = vadd.f32 %v1121, %v1951
    %v1953 = vpop.f32.mrb[0].mxu0
    %v1954 = vpop.f32.mrb[0].mxu0
    %1955 = vdwg.mxu0
    %1956 = vmatprep.subr.bf16.mxu0 %v1489
    %1957 = vmatpush1.bf16.msra.mxu0 %v1488
    %1958 = vmatprep.subr.bf16.mxu0 %v1513
    %1959 = vmatpush1.bf16.msra.mxu0 %v1512
    %1960 = vmatprep.subr.bf16.mxu0 %v1537
    %1961 = vmatpush1.bf16.msra.mxu0 %v1536
    %1962 = vmatprep.subr.bf16.mxu0 %v1561
    %1963 = vmatpush1.bf16.msra.mxu0 %v1560
    %1964 = vmatprep.subr.bf16.mxu0 0
    %1965 = vmatpush1.bf16.msra.mxu0 0
    %1966 = vmatprep.subr.bf16.mxu0 0
    %1967 = vmatpush1.bf16.msra.mxu0 0
    %1968 = vmatprep.subr.bf16.mxu0 0
    %1969 = vmatpush1.bf16.msra.mxu0 0
    %1970 = vmatprep.subr.bf16.mxu0 0
    %1971 = vmatpush1.bf16.msra.mxu0 0
    %1972 = vmatprep.subr.bf16.mxu0 0
    %1973 = vmatpush1.bf16.msra.mxu0 0
    %1974 = vmatprep.subr.bf16.mxu0 0
    %1975 = vmatpush1.bf16.msra.mxu0 0
    %1976 = vmatprep.subr.bf16.mxu0 0
    %1977 = vmatpush1.bf16.msra.mxu0 0
    %1978 = vmatprep.subr.bf16.mxu0 0
    %1979 = vmatpush1.bf16.msra.mxu0 0
    %1980 = vmatprep.subr.bf16.mxu0 0
    %1981 = vmatpush1.bf16.msra.mxu0 0
    %1982 = vmatprep.subr.bf16.mxu0 0
    %1983 = vmatpush1.bf16.msra.mxu0 0
    %1984 = vmatprep.subr.bf16.mxu0 0
    %1985 = vmatpush1.bf16.msra.mxu0 0
    %1986 = vmatprep.subr.bf16.mxu0 0
    %1987 = vmatpush1.bf16.msra.mxu0 0
    %1988 = vmatprep.mubr.bf16.mxu0 0
    %1989 = vmatmul.mubr.bf16.gmra.mrb[0].mxu0 %v1667
    %v1990 = vpop.f32.mrb[0].mxu0
    %v1991 = vadd.f32 %v1125, %v1990
    %v1992 = vpop.f32.mrb[0].mxu0
    %v1993 = vadd.f32 %v1129, %v1992
    %v1994 = vpop.f32.mrb[0].mxu0
    %v1995 = vpop.f32.mrb[0].mxu0
    %1996 = vdwg.mxu0
    %1997 = vmatprep.subr.bf16.mxu0 %v1491
    %1998 = vmatpush1.bf16.msra.mxu0 %v1490
    %1999 = vmatprep.subr.bf16.mxu0 %v1515
    %2000 = vmatpush1.bf16.msra.mxu0 %v1514
    %2001 = vmatprep.subr.bf16.mxu0 %v1539
    %2002 = vmatpush1.bf16.msra.mxu0 %v1538
    %2003 = vmatprep.subr.bf16.mxu0 %v1563
    %2004 = vmatpush1.bf16.msra.mxu0 %v1562
    %2005 = vmatprep.subr.bf16.mxu0 0
    %2006 = vmatpush1.bf16.msra.mxu0 0
    %2007 = vmatprep.subr.bf16.mxu0 0
    %2008 = vmatpush1.bf16.msra.mxu0 0
    %2009 = vmatprep.subr.bf16.mxu0 0
    %2010 = vmatpush1.bf16.msra.mxu0 0
    %2011 = vmatprep.subr.bf16.mxu0 0
    %2012 = vmatpush1.bf16.msra.mxu0 0
    %2013 = vmatprep.subr.bf16.mxu0 0
    %2014 = vmatpush1.bf16.msra.mxu0 0
    %2015 = vmatprep.subr.bf16.mxu0 0
    %2016 = vmatpush1.bf16.msra.mxu0 0
    %2017 = vmatprep.subr.bf16.mxu0 0
    %2018 = vmatpush1.bf16.msra.mxu0 0
    %2019 = vmatprep.subr.bf16.mxu0 0
    %2020 = vmatpush1.bf16.msra.mxu0 0
    %2021 = vmatprep.subr.bf16.mxu0 0
    %2022 = vmatpush1.bf16.msra.mxu0 0
    %2023 = vmatprep.subr.bf16.mxu0 0
    %2024 = vmatpush1.bf16.msra.mxu0 0
    %2025 = vmatprep.subr.bf16.mxu0 0
    %2026 = vmatpush1.bf16.msra.mxu0 0
    %2027 = vmatprep.subr.bf16.mxu0 0
    %2028 = vmatpush1.bf16.msra.mxu0 0
    %2029 = vmatprep.mubr.bf16.mxu0 0
    %2030 = vmatmul.mubr.bf16.gmra.mrb[0].mxu0 %v1667
    %v2031 = vpop.f32.mrb[0].mxu0
    %v2032 = vadd.f32 %v1133, %v2031
    %v2033 = vpop.f32.mrb[0].mxu0
    %v2034 = vadd.f32 %v1137, %v2033
    %v2035 = vpop.f32.mrb[0].mxu0
    %v2036 = vpop.f32.mrb[0].mxu0
    %2037 = vdwg.mxu0
    %2038 = vmatprep.subr.bf16.mxu0 %v1493
    %2039 = vmatpush1.bf16.msra.mxu0 %v1492
    %2040 = vmatprep.subr.bf16.mxu0 %v1517
    %2041 = vmatpush1.bf16.msra.mxu0 %v1516
    %2042 = vmatprep.subr.bf16.mxu0 %v1541
    %2043 = vmatpush1.bf16.msra.mxu0 %v1540
    %2044 = vmatprep.subr.bf16.mxu0 %v1565
    %2045 = vmatpush1.bf16.msra.mxu0 %v1564
    %2046 = vmatprep.subr.bf16.mxu0 0
    %2047 = vmatpush1.bf16.msra.mxu0 0
    %2048 = vmatprep.subr.bf16.mxu0 0
    %2049 = vmatpush1.bf16.msra.mxu0 0
    %2050 = vmatprep.subr.bf16.mxu0 0
    %2051 = vmatpush1.bf16.msra.mxu0 0
    %2052 = vmatprep.subr.bf16.mxu0 0
    %2053 = vmatpush1.bf16.msra.mxu0 0
    %2054 = vmatprep.subr.bf16.mxu0 0
    %2055 = vmatpush1.bf16.msra.mxu0 0
    %2056 = vmatprep.subr.bf16.mxu0 0
    %2057 = vmatpush1.bf16.msra.mxu0 0
    %2058 = vmatprep.subr.bf16.mxu0 0
    %2059 = vmatpush1.bf16.msra.mxu0 0
    %2060 = vmatprep.subr.bf16.mxu0 0
    %2061 = vmatpush1.bf16.msra.mxu0 0
    %2062 = vmatprep.subr.bf16.mxu0 0
    %2063 = vmatpush1.bf16.msra.mxu0 0
    %2064 = vmatprep.subr.bf16.mxu0 0
    %2065 = vmatpush1.bf16.msra.mxu0 0
    %2066 = vmatprep.subr.bf16.mxu0 0
    %2067 = vmatpush1.bf16.msra.mxu0 0
    %2068 = vmatprep.subr.bf16.mxu0 0
    %2069 = vmatpush1.bf16.msra.mxu0 0
    %2070 = vmatprep.mubr.bf16.mxu0 0
    %2071 = vmatmul.mubr.bf16.gmra.mrb[0].mxu0 %v1667
    %v2072 = vpop.f32.mrb[0].mxu0
    %v2073 = vadd.f32 %v1141, %v2072
    %v2074 = vpop.f32.mrb[0].mxu0
    %v2075 = vadd.f32 %v1145, %v2074
    %v2076 = vpop.f32.mrb[0].mxu0
    %v2077 = vpop.f32.mrb[0].mxu0
    %2078 = vdwg.mxu0
    %2079 = vmatprep.subr.bf16.mxu0 %v1495
    %2080 = vmatpush1.bf16.msra.mxu0 %v1494
    %2081 = vmatprep.subr.bf16.mxu0 %v1519
    %2082 = vmatpush1.bf16.msra.mxu0 %v1518
    %2083 = vmatprep.subr.bf16.mxu0 %v1543
    %2084 = vmatpush1.bf16.msra.mxu0 %v1542
    %2085 = vmatprep.subr.bf16.mxu0 %v1567
    %2086 = vmatpush1.bf16.msra.mxu0 %v1566
    %2087 = vmatprep.subr.bf16.mxu0 0
    %2088 = vmatpush1.bf16.msra.mxu0 0
    %2089 = vmatprep.subr.bf16.mxu0 0
    %2090 = vmatpush1.bf16.msra.mxu0 0
    %2091 = vmatprep.subr.bf16.mxu0 0
    %2092 = vmatpush1.bf16.msra.mxu0 0
    %2093 = vmatprep.subr.bf16.mxu0 0
    %2094 = vmatpush1.bf16.msra.mxu0 0
    %2095 = vmatprep.subr.bf16.mxu0 0
    %2096 = vmatpush1.bf16.msra.mxu0 0
    %2097 = vmatprep.subr.bf16.mxu0 0
    %2098 = vmatpush1.bf16.msra.mxu0 0
    %2099 = vmatprep.subr.bf16.mxu0 0
    %2100 = vmatpush1.bf16.msra.mxu0 0
    %2101 = vmatprep.subr.bf16.mxu0 0
    %2102 = vmatpush1.bf16.msra.mxu0 0
    %2103 = vmatprep.subr.bf16.mxu0 0
    %2104 = vmatpush1.bf16.msra.mxu0 0
    %2105 = vmatprep.subr.bf16.mxu0 0
    %2106 = vmatpush1.bf16.msra.mxu0 0
    %2107 = vmatprep.subr.bf16.mxu0 0
    %2108 = vmatpush1.bf16.msra.mxu0 0
    %2109 = vmatprep.subr.bf16.mxu0 0
    %2110 = vmatpush1.bf16.msra.mxu0 0
    %2111 = vmatprep.mubr.bf16.mxu0 0
    %2112 = vmatmul.mubr.bf16.gmra.mrb[0].mxu0 %v1667
    %v2113 = vpop.f32.mrb[0].mxu0
    %v2114 = vadd.f32 %v1149, %v2113
    %v2115 = vpop.f32.mrb[0].mxu0
    %v2116 = vadd.f32 %v1153, %v2115
    %v2117 = vpop.f32.mrb[0].mxu0
    %v2118 = vpop.f32.mrb[0].mxu0
    %2119 = vdwg.mxu0
    %2120 = vmatprep.subr.bf16.mxu0 %v1497
    %2121 = vmatpush1.bf16.msra.mxu0 %v1496
    %2122 = vmatprep.subr.bf16.mxu0 %v1521
    %2123 = vmatpush1.bf16.msra.mxu0 %v1520
    %2124 = vmatprep.subr.bf16.mxu0 %v1545
    %2125 = vmatpush1.bf16.msra.mxu0 %v1544
    %2126 = vmatprep.subr.bf16.mxu0 %v1569
    %2127 = vmatpush1.bf16.msra.mxu0 %v1568
    %2128 = vmatprep.subr.bf16.mxu0 0
    %2129 = vmatpush1.bf16.msra.mxu0 0
    %2130 = vmatprep.subr.bf16.mxu0 0
    %2131 = vmatpush1.bf16.msra.mxu0 0
    %2132 = vmatprep.subr.bf16.mxu0 0
    %2133 = vmatpush1.bf16.msra.mxu0 0
    %2134 = vmatprep.subr.bf16.mxu0 0
    %2135 = vmatpush1.bf16.msra.mxu0 0
    %2136 = vmatprep.subr.bf16.mxu0 0
    %2137 = vmatpush1.bf16.msra.mxu0 0
    %2138 = vmatprep.subr.bf16.mxu0 0
    %2139 = vmatpush1.bf16.msra.mxu0 0
    %2140 = vmatprep.subr.bf16.mxu0 0
    %2141 = vmatpush1.bf16.msra.mxu0 0
    %2142 = vmatprep.subr.bf16.mxu0 0
    %2143 = vmatpush1.bf16.msra.mxu0 0
    %2144 = vmatprep.subr.bf16.mxu0 0
    %2145 = vmatpush1.bf16.msra.mxu0 0
    %2146 = vmatprep.subr.bf16.mxu0 0
    %2147 = vmatpush1.bf16.msra.mxu0 0
    %2148 = vmatprep.subr.bf16.mxu0 0
    %2149 = vmatpush1.bf16.msra.mxu0 0
    %2150 = vmatprep.subr.bf16.mxu0 0
    %2151 = vmatpush1.bf16.msra.mxu0 0
    %2152 = vmatprep.mubr.bf16.mxu0 0
    %2153 = vmatmul.mubr.bf16.gmra.mrb[0].mxu0 %v1667
    %v2154 = vpop.f32.mrb[0].mxu0
    %v2155 = vadd.f32 %v1157, %v2154
    %v2156 = vpop.f32.mrb[0].mxu0
    %v2157 = vadd.f32 %v1161, %v2156
    %v2158 = vpop.f32.mrb[0].mxu0
    %v2159 = vpop.f32.mrb[0].mxu0
    %2160 = vdwg.mxu0
    %v2161 = vmax.f32 %v1704, 0.0
    %v2162 = vmax.f32 %v1706, 0.0
    %v2163 = vmax.f32 %v1745, 0.0
    %v2164 = vmax.f32 %v1747, 0.0
    %v2165 = vmax.f32 %v1786, 0.0
    %v2166 = vmax.f32 %v1788, 0.0
    %v2167 = vmax.f32 %v1827, 0.0
    %v2168 = vmax.f32 %v1829, 0.0
    %v2169 = vmax.f32 %v1868, 0.0
    %v2170 = vmax.f32 %v1870, 0.0
    %v2171 = vmax.f32 %v1909, 0.0
    %v2172 = vmax.f32 %v1911, 0.0
    %v2173 = vmax.f32 %v1950, 0.0
    %v2174 = vmax.f32 %v1952, 0.0
    %v2175 = vmax.f32 %v1991, 0.0
    %v2176 = vmax.f32 %v1993, 0.0
    %v2177 = vmax.f32 %v2032, 0.0
    %v2178 = vmax.f32 %v2034, 0.0
    %v2179 = vmax.f32 %v2073, 0.0
    %v2180 = vmax.f32 %v2075, 0.0
    %v2181 = vmax.f32 %v2114, 0.0
    %v2182 = vmax.f32 %v2116, 0.0
    %v2183 = vmax.f32 %v2155, 0.0
    %v2184 = vmax.f32 %v2157, 0.0
    %v2185 = vld [vmem:[%s9] sm:$0x1]
    %v2187 = vlaneseq
    %v2188 = vshrl.u32 %v2187, 7
    %v2189 = vsub.s32 0, %v2188
    %v2190 = vrot.slane %v2185, %v2189
    %v2192 = vadd.f32 %v2190, 0.0
    %v2193 = vadd.f32 %v2161, %v2162
    %v2194 = vadd.f32 %v2193, %v2163
    %v2195 = vadd.f32 %v2194, %v2164
    %v2196 = vadd.f32 %v2195, %v2165
    %v2197 = vadd.f32 %v2196, %v2166
    %v2198 = vadd.f32 %v2197, %v2167
    %v2199 = vadd.f32 %v2198, %v2168
    %2200 = vadd.xlane.f32.xlu0 %v2199
    %v2201 = vpop.xlane.xlu0 %2200
    %v2202 = vmul.f32 %v2201, 0.0009765625
    %v2203 = vld [vmem:[%s8] sm:$0x1]
    %v2204 = vlaneseq
    %v2205 = vshrl.u32 %v2204, 7
    %v2206 = vsub.s32 0, %v2205
    %v2207 = vrot.slane %v2203, %v2206
    %v2208 = vmul.f32 %v2202, %v2207
    %v2209 = vadd.f32 %v2192, %v2208
    %v2210 = vadd.f32 %v2169, %v2170
    %v2211 = vadd.f32 %v2210, %v2171
    %v2212 = vadd.f32 %v2211, %v2172
    %v2213 = vadd.f32 %v2212, %v2173
    %v2214 = vadd.f32 %v2213, %v2174
    %v2215 = vadd.f32 %v2214, %v2175
    %v2216 = vadd.f32 %v2215, %v2176
    %2217 = vadd.xlane.f32.xlu0 %v2216
    %v2218 = vpop.xlane.xlu0 %2217
    %v2219 = vmul.f32 %v2218, 0.0009765625
    %v2220 = vld [vmem:[%s8 + $0x1] sm:$0x1]
    %v2221 = vlaneseq
    %v2222 = vshrl.u32 %v2221, 7
    %v2223 = vsub.s32 0, %v2222
    %v2224 = vrot.slane %v2220, %v2223
    %v2225 = vmul.f32 %v2219, %v2224
    %v2226 = vadd.f32 %v2209, %v2225
    %v2227 = vadd.f32 %v2177, %v2178
    %v2228 = vadd.f32 %v2227, %v2179
    %v2229 = vadd.f32 %v2228, %v2180
    %v2230 = vadd.f32 %v2229, %v2181
    %v2231 = vadd.f32 %v2230, %v2182
    %v2232 = vadd.f32 %v2231, %v2183
    %v2233 = vadd.f32 %v2232, %v2184
    %2234 = vadd.xlane.f32.xlu0 %v2233
    %v2235 = vpop.xlane.xlu0 %2234
    %v2236 = vmul.f32 %v2235, 0.0009765625
    %v2237 = vld [vmem:[%s8 + $0x2] sm:$0x1]
    %v2238 = vlaneseq
    %v2239 = vshrl.u32 %v2238, 7
    %v2240 = vsub.s32 0, %v2239
    %v2241 = vrot.slane %v2237, %v2240
    %v2242 = vmul.f32 %v2236, %v2241
    %v2243 = vadd.f32 %v2226, %v2242
    %2244 = vst [vmem:[%s10] sm:$0xff] %v2243
    // Predicated region
    $region46: #{venezia_forward.1} parent=1 // pred_check
      _
    $region47: #{venezia_forward.1} parent=1 // pred_check_branch
      %2246 = sbr.rel (0) target = $region49
    $region48: #{venezia_forward.1} parent=1 // pred_region
      _
    $region49: #{venezia_forward.1} parent=1 // pred_fallthru
      _
    // Predicated region
    $region50: #{venezia_forward.1} parent=1 // pred_check
      _
    $region51: #{venezia_forward.1} parent=1 // pred_check_branch
      %2248 = sbr.rel (0) target = $region53
    $region52: #{venezia_forward.1} parent=1 // pred_region
      _
    $region53: #{venezia_forward.1} parent=1 // pred_fallthru
      _
    %2249 = vsyncpa [#allocation3], 1

</llo_original>
